<compile_context>
chip_gen: v7x
topology: tpu7x:2x2x1
jax: 0.10.0
libtpu: 0.0.40
codegen_flags: <defaults>
</compile_context>

<pallas_src>
import jax
import jax.numpy as jnp
from jax import lax
from jax.experimental import pallas as pl
from jax.experimental.pallas import tpu as pltpu

_LANES = 128


def _make_kernel(hw_true, chunk, num_chunks, precision):
    """Build the fused kernel closure for static (true HW, chunk, #chunks)."""
    inv_hw = 1.0 / float(hw_true)

    def kernel(x_ref, w1_ref, b1_ref, w2_ref, b2_ref, out_ref, acc_ref):
        # x_ref  : [1, C, THW]  spatial tile of image b = program_id(0)
        # w1_ref : [C, D]       1x1-conv weight   (VMEM resident)
        # b1_ref : [D, 1]       conv bias         (VMEM resident)
        # w2_ref : [D, 1]       head weight       (VMEM resident)
        # b2_ref : [1, 1]       head bias (+ zero-pad correction), SMEM scalar
        # out_ref: [1, 8, 128]  lane-dense logit tile for this image
        # acc_ref: [D, 128]     per-lane partial spatial sums (f32 scratch)
        h_idx = pl.program_id(1)

        @pl.when(h_idx == 0)
        def _init():
            acc_ref[...] = jnp.zeros_like(acc_ref)

        # Stream the spatial tile through the MXU in lane-aligned chunks so
        # the live intermediate stays [D, chunk] (~1 MiB) instead of [D, THW].
        @pl.loop(0, num_chunks)
        def _chunk(i):
            start = pl.multiple_of(i * chunk, chunk)
            xc = x_ref[0, :, pl.ds(start, chunk)]                 # [C, chunk]
            # C-contraction on the MXU: no lane<->sublane relayout of the big
            # operand; result has D on sublanes, spatial on lanes, f32 accum.
            h = lax.dot_general(
                w1_ref[...], xc,
                dimension_numbers=(((0,), (0,)), ((), ())),
                preferred_element_type=jnp.float32,
                precision=precision)                              # [D, chunk]
            h = jnp.maximum(h + b1_ref[...], 0.0)                 # bias + ReLU
            # Per-lane partial sums via static, 128-aligned lane slices (free);
            # the expensive cross-lane reduce happens once, in finalize.
            part = h[:, 0:_LANES]
            for t in range(1, chunk // _LANES):
                part = part + h[:, t * _LANES:(t + 1) * _LANES]
            acc_ref[...] += part

        @pl.when(h_idx == pl.num_programs(1) - 1)
        def _finalize():
            # Linear(D, 1) head folded into the cross-lane reduction:
            #   logit = (1/HW) * sum_{d,l} acc[d, l] * w2[d] + b2_adj
            # (zero-padding correction already folded into b2_adj host-side).
            s = jnp.sum(acc_ref[...] * w2_ref[...])               # scalar
            logit = s * inv_hw + b2_ref[0, 0]
            out_ref[...] = jnp.broadcast_to(logit, out_ref.shape).astype(
                out_ref.dtype)

    return kernel


def breast_cancer_forward(x_nchw, w1, b1, w2, b2, *, hw_tile=8192,
                          chunk_max=2048):
    """Fused synthetic-backbone + Linear(D, 1) head forward pass.

    x_nchw: [B, C, H, W] (float32 or bfloat16 -- feed bfloat16 on v6e/v7x to
        halve HBM traffic and use the packed-bf16 MXU path; bias/ReLU and the
        spatial accumulation always run in float32).
    Returns squeezed cancer logits (shape [B], scalar if B == 1), matching
    `self.nn_cancer(self.model(x)).squeeze()`.
    """
    assert hw_tile % chunk_max == 0 and chunk_max % _LANES == 0
    B, C, H, W = x_nchw.shape
    Cw, D = w1.shape
    assert Cw == C
    HW = H * W

    # NCHW -> [B, C, H*W]: a free reshape (no transpose); HW lands on lanes.
    x_flat = x_nchw.reshape(B, C, HW)

    # Spatial tiling: lane-aligned, big enough to amortize per-grid-step
    # overhead; the kernel chunks it internally to cap VMEM/vreg pressure.
    hw_rounded = ((HW + _LANES - 1) // _LANES) * _LANES
    if hw_rounded <= hw_tile:
        chunk = min(chunk_max, hw_rounded)
        thw = ((hw_rounded + chunk - 1) // chunk) * chunk
    else:
        chunk = chunk_max
        thw = hw_tile
    hw_pad = ((HW + thw - 1) // thw) * thw
    num_tiles = hw_pad // thw
    num_chunks = thw // chunk
    n_pad = hw_pad - HW

    if hw_pad != HW:
        # NOTE: the kernel relies on this being a ZERO pad -- each padded
        # position contributes exactly relu(b1), which is subtracted
        # analytically via the adjusted head bias below (no per-step mask).
        x_flat = jnp.pad(x_flat, ((0, 0), (0, 0), (0, n_pad)))

    # Host-side parameter plumbing (tiny): column layouts so the kernel's
    # [D, chunk] tiles (D on sublanes, spatial on lanes) broadcast cheaply.
    w1_k = w1.astype(x_flat.dtype)                 # match MXU operand dtype
    b1_col = b1.reshape(D, 1).astype(jnp.float32)
    w2_col = w2.reshape(D, 1).astype(jnp.float32)
    b2_adj = (jnp.reshape(b2, (1, 1)).astype(jnp.float32)
              - (float(n_pad) / float(HW))
              * jnp.sum(w2_col * jnp.maximum(b1_col, 0.0)))

    precision = (lax.Precision.HIGHEST
                 if x_flat.dtype == jnp.float32 else None)
    kernel = _make_kernel(HW, chunk, num_chunks, precision)

    itemsize = jnp.dtype(x_flat.dtype).itemsize
    cost = pl.CostEstimate(
        flops=2 * B * HW * C * D + 3 * B * HW * D + 2 * B * D,
        transcendentals=0,
        bytes_accessed=(B * C * hw_pad * itemsize
                        + (C * D + 2 * D + 1) * 4
                        + B * 8 * _LANES * 4),
    )

    out = pl.pallas_call(
        kernel,
        out_shape=jax.ShapeDtypeStruct((B, 8, _LANES), jnp.float32),
        grid_spec=pltpu.PrefetchScalarGridSpec(
            num_scalar_prefetch=0,
            grid=(B, num_tiles),
            in_specs=[
                # x: one image's spatial tile per step (double-buffered stream).
                pl.BlockSpec((1, C, thw), lambda b, h: (b, 0, h)),
                # Weights: constant index_map -> VMEM resident, no per-step DMA.
                pl.BlockSpec((C, D), lambda b, h: (0, 0)),
                pl.BlockSpec((D, 1), lambda b, h: (0, 0)),
                pl.BlockSpec((D, 1), lambda b, h: (0, 0)),
                # Adjusted head-bias scalar in SMEM.
                pl.BlockSpec(memory_space=pltpu.MemorySpace.SMEM),
            ],
            # Lane-dense (8,128) logit tile, disjoint per batch index -> the
            # parallel batch axis is race-free on v7x megacore.
            out_specs=pl.BlockSpec((1, 8, _LANES), lambda b, h: (b, 0, 0)),
            scratch_shapes=[pltpu.VMEM((D, _LANES), jnp.float32)],
        ),
        compiler_params=pltpu.CompilerParams(
            # Batch axis parallel (uses both v7x TensorCores); spatial axis is
            # the accumulation -> arbitrary.
            dimension_semantics=("parallel", "arbitrary"),
            vmem_limit_bytes=16 * 1024 * 1024,
        ),
        cost_estimate=cost,
    )(x_flat, w1_k, b1_col, w2_col, b2_adj)

    # matches `self.nn_cancer(x).squeeze()`
    return jnp.squeeze(out[:, 0, 0])


def init_params(key, c_in, backbone_dim):
    """Deterministic PyTorch-Linear-style init (uniform +/- 1/sqrt(fan_in))."""
    k1, k2, k3, k4 = jax.random.split(key, 4)
    s1 = 1.0 / jnp.sqrt(jnp.float32(c_in))
    s2 = 1.0 / jnp.sqrt(jnp.float32(backbone_dim))
    w1 = jax.random.uniform(k1, (c_in, backbone_dim), jnp.float32, -s1, s1)
    b1 = jax.random.uniform(k2, (1, backbone_dim), jnp.float32, -s1, s1)
    # nn.Linear(backbone_dim, 1).weight has shape [1, backbone_dim].
    w2 = jax.random.uniform(k3, (1, backbone_dim), jnp.float32, -s2, s2)
    b2 = jax.random.uniform(k4, (1, 1), jnp.float32, -s2, s2)
    return w1, b1, w2, b2


if __name__ == "__main__":
    # Small shapes consistent with the module: 3-channel image, H = 2*W
    # (the original uses 512x256; we use 16x8), batch=2.
    B, C, H, W = 2, 3, 16, 8
    BACKBONE_DIM = 128

    key = jax.random.PRNGKey(0)
    kx, kp = jax.random.split(key)
    x = jax.random.normal(kx, (B, C, H, W), dtype=jnp.float32)
    w1, b1, w2, b2 = init_params(kp, C, BACKBONE_DIM)

    cancer = jax.block_until_ready(breast_cancer_forward(x, w1, b1, w2, b2))

    # Pure-JAX reference of the same synthetic forward pass (f32 math).
    def reference(xv, w1v):
        xf = xv.reshape(B, C, H * W).astype(jnp.float32)
        w1f = w1v.astype(jnp.float32)
        h = jnp.einsum("bcp,cd->bpd", xf, w1f,
                       precision=lax.Precision.HIGHEST) + b1[None]
        feat = jnp.mean(jnp.maximum(h, 0.0), axis=1)           # [B, D]
        return jnp.squeeze(jnp.sum(feat * w2, axis=-1) + b2[0, 0])

    ref = reference(x, w1)
    assert cancer.shape == (B,)
    assert jnp.allclose(cancer, ref, atol=1e-4, rtol=1e-4), (cancer, ref)

    # bf16 input path (intended production configuration on v6e/v7x).
    x_bf16 = x.astype(jnp.bfloat16)
    cancer_bf16 = jax.block_until_ready(
        breast_cancer_forward(x_bf16, w1, b1, w2, b2))
    ref_bf16 = reference(x_bf16, w1.astype(jnp.bfloat16))
    assert jnp.allclose(cancer_bf16, ref_bf16, atol=5e-3, rtol=5e-3), (
        cancer_bf16, ref_bf16)

    print("KERNEL_OK")
</pallas_src>

<mosaic_0001>
module attributes {stable_mosaic.version = 11 : i64} {
  func.func @kernel(%arg0: i32, %arg1: i32, %arg2: memref<1x3x128xf32, #tpu.memory_space<vmem>>, %arg3: memref<3x128xf32, #tpu.memory_space<vmem>>, %arg4: memref<128x1xf32, #tpu.memory_space<vmem>>, %arg5: memref<128x1xf32, #tpu.memory_space<vmem>>, %arg6: memref<1x1xf32, #tpu.memory_space<smem>>, %arg7: memref<1x8x128xf32, #tpu.memory_space<vmem>>, %arg8: memref<128x128xf32, #tpu.memory_space<vmem>>) attributes {dimension_semantics = [#tpu.dimension_semantics<parallel>, #tpu.dimension_semantics<arbitrary>], iteration_bounds = array<i64: 2, 1>, scalar_prefetch = 0 : i64, scratch_operands = 1 : i64, tpu.core_type = #tpu.core_type<tc>, window_params = [{transform_indices = @transform_0, window_bounds = array<i64: 1, 3, 128>}, {pipeline_mode = #tpu.pipeline_mode<synchronous>, transform_indices = @transform_1, window_bounds = array<i64: 3, 128>}, {pipeline_mode = #tpu.pipeline_mode<synchronous>, transform_indices = @transform_2, window_bounds = array<i64: 128, 1>}, {pipeline_mode = #tpu.pipeline_mode<synchronous>, transform_indices = @transform_3, window_bounds = array<i64: 128, 1>}, {transform_indices = @transform_4, window_bounds = array<i64: 1, 1>}, {transform_indices = @transform_5, window_bounds = array<i64: 1, 8, 128>}]} {
    %c0_i32 = arith.constant 0 : i32
    %0 = arith.cmpi eq, %arg1, %c0_i32 : i32
    %1 = arith.extui %0 : i1 to i32
    %c0_i32_0 = arith.constant 0 : i32
    %2 = arith.cmpi ne, %1, %c0_i32_0 : i32
    scf.if %2 {
      %cst_16 = arith.constant 0.000000e+00 : f32
      %23 = vector.broadcast %cst_16 : f32 to vector<128x128xf32>
      %c0_17 = arith.constant 0 : index
      %c0_18 = arith.constant 0 : index
      %24 = vector.load %arg8[%c0_17, %c0_18] : memref<128x128xf32, #tpu.memory_space<vmem>>, vector<128x128xf32>
      tpu.vector_store %arg8[%c0_17, %c0_18], %23 {strides = array<i32>} : memref<128x128xf32, #tpu.memory_space<vmem>>, vector<128x128xf32>,
    } else {
    }
    %c0_i32_1 = arith.constant 0 : i32
    %c1_i32 = arith.constant 1 : i32
    %3 = arith.muli %c0_i32_1, %c1_i32 : i32
    %c0_i32_2 = arith.constant 0 : i32
    %4 = arith.addi %c0_i32_2, %3 : i32
    %c128_i32 = arith.constant 128 : i32
    %5 = arith.muli %4, %c128_i32 : i32
    %6 = tpu.assume_multiple %5, 128 : i32
    %c0 = arith.constant 0 : index
    %c0_3 = arith.constant 0 : index
    %7 = arith.index_cast %6 : i32 to index
    %8 = vector.load %arg2[%c0, %c0_3, %7] : memref<1x3x128xf32, #tpu.memory_space<vmem>>, vector<1x3x128xf32>
    %9 = vector.shape_cast %8 : vector<1x3x128xf32> to vector<3x128xf32>
    %c0_4 = arith.constant 0 : index
    %c0_5 = arith.constant 0 : index
    %10 = vector.load %arg3[%c0_4, %c0_5] : memref<3x128xf32, #tpu.memory_space<vmem>>, vector<3x128xf32>
    %cst = arith.constant dense<0.000000e+00> : vector<128x128xf32>
    %11 = tpu.matmul %10, %9, %cst {dimension_numbers = #tpu.dot_dimension_numbers<[0], [0], [1], [1], [0, 1, 1, 1], [], []>, precision = #tpu.contract_precision<fp32>} : vector<3x128xf32>, vector<3x128xf32>, vector<128x128xf32> -> vector<128x128xf32>
    %c0_6 = arith.constant 0 : index
    %c0_7 = arith.constant 0 : index
    %12 = vector.load %arg4[%c0_6, %c0_7] : memref<128x1xf32, #tpu.memory_space<vmem>>, vector<128x1xf32>
    %13 = vector.broadcast %12 : vector<128x1xf32> to vector<128x128xf32>
    %14 = arith.addf %11, %13 : vector<128x128xf32>
    %cst_8 = arith.constant 0.000000e+00 : f32
    %15 = vector.broadcast %cst_8 : f32 to vector<128x128xf32>
    %16 = arith.maximumf %14, %15 : vector<128x128xf32>
    %c0_9 = arith.constant 0 : index
    %c0_10 = arith.constant 0 : index
    %17 = vector.load %arg8[%c0_9, %c0_10] : memref<128x128xf32, #tpu.memory_space<vmem>>, vector<128x128xf32>
    %18 = arith.addf %17, %16 : vector<128x128xf32>
    %c0_11 = arith.constant 0 : index
    %c0_12 = arith.constant 0 : index
    %19 = vector.load %arg8[%c0_11, %c0_12] : memref<128x128xf32, #tpu.memory_space<vmem>>, vector<128x128xf32>
    tpu.vector_store %arg8[%c0_11, %c0_12], %18 {strides = array<i32>} : memref<128x128xf32, #tpu.memory_space<vmem>>, vector<128x128xf32>,
    %c1_i32_13 = arith.constant 1 : i32
    %c0_i32_14 = arith.constant 0 : i32
    %20 = arith.cmpi eq, %arg1, %c0_i32_14 : i32
    %21 = arith.extui %20 : i1 to i32
    %c0_i32_15 = arith.constant 0 : i32
    %22 = arith.cmpi ne, %21, %c0_i32_15 : i32
    scf.if %22 {
      %c0_16 = arith.constant 0 : index
      %c0_17 = arith.constant 0 : index
      %23 = vector.load %arg8[%c0_16, %c0_17] : memref<128x128xf32, #tpu.memory_space<vmem>>, vector<128x128xf32>
      %c0_18 = arith.constant 0 : index
      %c0_19 = arith.constant 0 : index
      %24 = vector.load %arg5[%c0_18, %c0_19] : memref<128x1xf32, #tpu.memory_space<vmem>>, vector<128x1xf32>
      %25 = vector.broadcast %24 : vector<128x1xf32> to vector<128x128xf32>
      %26 = arith.mulf %23, %25 : vector<128x128xf32>
      %27 = vector.shape_cast %26 : vector<128x128xf32> to vector<1x128x128xf32>
      %cst_20 = arith.constant dense<0.000000e+00> : vector<1xf32>
      %28 = vector.multi_reduction <add>, %27, %cst_20 [1, 2] : vector<1x128x128xf32> to vector<1xf32>
      %29 = vector.shape_cast %28 : vector<1xf32> to vector<1x1x1xf32>
      %30 = vector.extract %29[0, 0, 0] : f32 from vector<1x1x1xf32>
      %cst_21 = arith.constant 7.812500e-03 : f32
      %31 = arith.mulf %30, %cst_21 : f32
      %c0_22 = arith.constant 0 : index
      %c0_23 = arith.constant 0 : index
      %32 = memref.load %arg6[%c0_22, %c0_23] : memref<1x1xf32, #tpu.memory_space<smem>>
      %33 = arith.addf %31, %32 : f32
      %34 = vector.broadcast %33 : f32 to vector<1x8x128xf32>
      %c0_24 = arith.constant 0 : index
      %c0_25 = arith.constant 0 : index
      %c0_26 = arith.constant 0 : index
      %35 = vector.load %arg7[%c0_24, %c0_25, %c0_26] : memref<1x8x128xf32, #tpu.memory_space<vmem>>, vector<1x8x128xf32>
      tpu.vector_store %arg7[%c0_24, %c0_25, %c0_26], %34 {strides = array<i32>} : memref<1x8x128xf32, #tpu.memory_space<vmem>>, vector<1x8x128xf32>,
    } else {
    }
    return
  }
  func.func @transform_0(%arg0: i32, %arg1: i32) -> (i32, i32, i32) {
    %c0_i32 = arith.constant 0 : i32
    %c0_i32_0 = arith.constant 0 : i32
    return %arg0, %c0_i32, %arg1 : i32, i32, i32
  }
  func.func @transform_1(%arg0: i32, %arg1: i32) -> (i32, i32) {
    %c0_i32 = arith.constant 0 : i32
    %c0_i32_0 = arith.constant 0 : i32
    %c0_i32_1 = arith.constant 0 : i32
    return %c0_i32, %c0_i32_0 : i32, i32
  }
  func.func @transform_2(%arg0: i32, %arg1: i32) -> (i32, i32) {
    %c0_i32 = arith.constant 0 : i32
    %c0_i32_0 = arith.constant 0 : i32
    %c0_i32_1 = arith.constant 0 : i32
    return %c0_i32, %c0_i32_0 : i32, i32
  }
  func.func @transform_3(%arg0: i32, %arg1: i32) -> (i32, i32) {
    %c0_i32 = arith.constant 0 : i32
    %c0_i32_0 = arith.constant 0 : i32
    %c0_i32_1 = arith.constant 0 : i32
    return %c0_i32, %c0_i32_0 : i32, i32
  }
  func.func @transform_4(%arg0: i32, %arg1: i32) -> (i32, i32) {
    %c0_i32 = arith.constant 0 : i32
    %c0_i32_0 = arith.constant 0 : i32
    %c0_i32_1 = arith.constant 0 : i32
    return %c0_i32, %c0_i32_0 : i32, i32
  }
  func.func @transform_5(%arg0: i32, %arg1: i32) -> (i32, i32, i32) {
    %c0_i32 = arith.constant 0 : i32
    %c0_i32_0 = arith.constant 0 : i32
    %c0_i32_1 = arith.constant 0 : i32
    return %arg0, %c0_i32, %c0_i32_0 : i32, i32, i32
  }
}

</mosaic_0001>

<llo_original>
// kernel: tpu_custom_call.1
$region0: #{tpu_custom_call.1}
  #allocation0 [shape = 'u32[]', space=smem, size = 0x4, offset = 0x4, fixed_abs, tag = 'smem constant byte address 0x4 - core index']
  #allocation1 [shape = 'u32[144,128]{1,0:T(1,128)}', space=vmem, size = 0x12000, scoped, tag = 'internal scratch']
  #allocation2 [shape = 'f32[128,128]{1,0:T(8,128)}', space=vmem, size = 0x10000, scoped, tag = 'scratch operand']
  #allocation3 [shape = 'f32[1,1]{1,0:T(1,128)S(6)}', space=smem, size = 0x200, scoped, tag = 'scoped memory for tpu_custom_call.1']
  %s0 = inlined_call_operand.vmem [shape: f32[2,3,128], index: 0, kind: input, shape index: {}]
  %s1 = inlined_call_operand.vmem [shape: f32[3,128], index: 1, kind: input, shape index: {}]
  %s2 = inlined_call_operand.vmem [shape: f32[128,1], index: 2, kind: input, shape index: {}]
  %s3 = inlined_call_operand.vmem [shape: f32[128,1], index: 3, kind: input, shape index: {}]
  %s4 = inlined_call_operand.<no memory space> [shape: f32[1,1], index: 4, kind: input, shape index: {}]
  %s5 = inlined_call_operand.hbm [shape: f32[2,8,128], index: 5, kind: output, shape index: {}]
  %s6 = sld [smem:[#allocation0]]
  $region61: #{tpu_custom_call.1} parent=0
    _
  %s8 = ssub.s32 1, %s6
  %s9 = scalar_select 0, %s8, %s6
  %10 = sst [smem:[#allocation3]] %s4
  $region1: #{tpu_custom_call.1} parent=0
    #allocation4 [shape = 'u8[8192]{0}', space=vmem, size = 0x2000, scoped, tag = 'output window, operand 0']
    #allocation5 [shape = 's32[2]{0}', space=sflag, size = 0x8, scoped, tag = 'scoped memory for tpu_custom_call.1']
    %11 = vsyncpa [#allocation5], 0
    %s12 = scalar_lea.sflag [#allocation5], 1
    %13 = vsyncpa %s12, 0
    loop: start=0, step=1, limit=4
    $region2: #{tpu_custom_call.1} parent=1 // loop_pre_header
      _
    $region3: #{tpu_custom_call.1} parent=1 // loop_header
      %s15 = sphi 0, %s19
      %p16 = scmp.ge.s32.totalorder %s15, 4
      %s22 = sphi 0, %s34
      %s23 = sphi 0, %s30
      %s24 = sphi 0, %s22
      %s25 = sphi 0, %s23
      %s26 = sphi 0, %s24
      %s27 = sphi 0, %s25
      %s39 = sphi 0, %s41
      %s42 = sphi 0, %s39
      %s43 = sphi 0, %s42
      %s59 = sphi 0, %s43
      %s63 = sphi 0, %s63
      %s65 = sphi 0, %s63
      %s66 = sphi 0, %s65
      %s80 = sphi 0, %s66
      %s84 = sphi 0, %s84
      %s86 = sphi 0, %s84
      %s87 = sphi 0, %s86
      %s101 = sphi 0, %s87
      %s105 = sphi 0, %s105
      %s107 = sphi 0, %s105
      %s108 = sphi 0, %s107
      %s122 = sphi 0, %s108
      %s126 = sphi 0, %s126
      %s128 = sphi 0, %s126
      %s129 = sphi 0, %s128
      %s143 = sphi 0, %s129
      %s149 = sphi 0, %s151
      %s152 = sphi 0, %s149
      %s153 = sphi 0, %s152
      %s169 = sphi 0, %s153
    $region4: #{tpu_custom_call.1} parent=1 // loop_header_branch
      %18 = sbr.rel (%p16) target = $region8
    $region5: #{tpu_custom_call.1} parent=1 // loop_body
      %s20 = ssub.s32 %s15, 1
      %s21 = ssub.s32 %s15, 2
      %s28 = sadd.s32 1, %s23
      %p29 = scmp.ge.s32.totalorder %s28, 1
      %s30 = scalar_select %p29, 0, %s28
      %s31 = sadd.s32 1, %s22
      %s32 = scalar_select %p29, %s31, %s22
      %p33 = scmp.ge.s32.totalorder %s32, 2
      %s34 = scalar_select %p33, 0, %s32
      %s35 = ssub.s32 %s22, %s34
      %s36 = ssub.s32 %s23, %s30
      %s37 = sor.u32 %s35, %s36
      %p38 = scmp.eq.s32.totalorder %s37, 0
      %s40 = sadd.s32 %s39, 1
      %s41 = scalar_select %p38, %s39, %s40
      %p44 = pneg %p38
      %p45 = scmp.eq.s32.totalorder %s15, 1
      %p46 = por %p44, %p45
      %p47 = scmp.ne.s32.totalorder %s39, %s42
      %p48 = scmp.eq.s32.totalorder %s15, 0
      %p49 = por %p47, %p48
      %p50 = scmp.ne.s32.totalorder %s39, %s42
      %p51 = scmp.eq.s32.totalorder %s20, 1
      %p52 = por %p50, %p51
      %p53 = scmp.ne.s32.totalorder %s42, %s43
      %p54 = scmp.eq.s32.totalorder %s20, 0
      %p55 = por %p53, %p54
      %p56 = scmp.ne.s32.totalorder %s42, %s43
      %p57 = scmp.eq.s32.totalorder %s21, 1
      %p58 = por %p56, %p57
      %p60 = scmp.ne.s32.totalorder %s43, %s59
      %p61 = scmp.eq.s32.totalorder %s21, 0
      %p62 = por %p60, %p61
      %s64 = sadd.s32 %s63, 1
      %p67 = scmp.eq.s32.totalorder %s15, 1
      %p68 = scmp.ne.s32.totalorder %s63, %s65
      %p69 = scmp.eq.s32.totalorder %s15, 0
      %p70 = por %p68, %p69
      %p71 = scmp.ne.s32.totalorder %s63, %s65
      %p72 = scmp.eq.s32.totalorder %s20, 1
      %p73 = por %p71, %p72
      %p74 = scmp.ne.s32.totalorder %s65, %s66
      %p75 = scmp.eq.s32.totalorder %s20, 0
      %p76 = por %p74, %p75
      %p77 = scmp.ne.s32.totalorder %s65, %s66
      %p78 = scmp.eq.s32.totalorder %s21, 1
      %p79 = por %p77, %p78
      %p81 = scmp.ne.s32.totalorder %s66, %s80
      %p82 = scmp.eq.s32.totalorder %s21, 0
      %p83 = por %p81, %p82
      %s85 = sadd.s32 %s84, 1
      %p88 = scmp.eq.s32.totalorder %s15, 1
      %p89 = scmp.ne.s32.totalorder %s84, %s86
      %p90 = scmp.eq.s32.totalorder %s15, 0
      %p91 = por %p89, %p90
      %p92 = scmp.ne.s32.totalorder %s84, %s86
      %p93 = scmp.eq.s32.totalorder %s20, 1
      %p94 = por %p92, %p93
      %p95 = scmp.ne.s32.totalorder %s86, %s87
      %p96 = scmp.eq.s32.totalorder %s20, 0
      %p97 = por %p95, %p96
      %p98 = scmp.ne.s32.totalorder %s86, %s87
      %p99 = scmp.eq.s32.totalorder %s21, 1
      %p100 = por %p98, %p99
      %p102 = scmp.ne.s32.totalorder %s87, %s101
      %p103 = scmp.eq.s32.totalorder %s21, 0
      %p104 = por %p102, %p103
      %s106 = sadd.s32 %s105, 1
      %p109 = scmp.eq.s32.totalorder %s15, 1
      %p110 = scmp.ne.s32.totalorder %s105, %s107
      %p111 = scmp.eq.s32.totalorder %s15, 0
      %p112 = por %p110, %p111
      %p113 = scmp.ne.s32.totalorder %s105, %s107
      %p114 = scmp.eq.s32.totalorder %s20, 1
      %p115 = por %p113, %p114
      %p116 = scmp.ne.s32.totalorder %s107, %s108
      %p117 = scmp.eq.s32.totalorder %s20, 0
      %p118 = por %p116, %p117
      %p119 = scmp.ne.s32.totalorder %s107, %s108
      %p120 = scmp.eq.s32.totalorder %s21, 1
      %p121 = por %p119, %p120
      %p123 = scmp.ne.s32.totalorder %s108, %s122
      %p124 = scmp.eq.s32.totalorder %s21, 0
      %p125 = por %p123, %p124
      %s127 = sadd.s32 %s126, 1
      %p130 = scmp.eq.s32.totalorder %s15, 1
      %p131 = scmp.ne.s32.totalorder %s126, %s128
      %p132 = scmp.eq.s32.totalorder %s15, 0
      %p133 = por %p131, %p132
      %p134 = scmp.ne.s32.totalorder %s126, %s128
      %p135 = scmp.eq.s32.totalorder %s20, 1
      %p136 = por %p134, %p135
      %p137 = scmp.ne.s32.totalorder %s128, %s129
      %p138 = scmp.eq.s32.totalorder %s20, 0
      %p139 = por %p137, %p138
      %p140 = scmp.ne.s32.totalorder %s128, %s129
      %p141 = scmp.eq.s32.totalorder %s21, 1
      %p142 = por %p140, %p141
      %p144 = scmp.ne.s32.totalorder %s129, %s143
      %p145 = scmp.eq.s32.totalorder %s21, 0
      %p146 = por %p144, %p145
      %s147 = ssub.s32 %s22, %s34
      %p148 = scmp.eq.s32.totalorder %s147, 0
      %s150 = sadd.s32 %s149, 1
      %s151 = scalar_select %p148, %s149, %s150
      %p154 = pneg %p148
      %p155 = scmp.eq.s32.totalorder %s15, 1
      %p156 = por %p154, %p155
      %p157 = scmp.ne.s32.totalorder %s149, %s152
      %p158 = scmp.eq.s32.totalorder %s15, 0
      %p159 = por %p157, %p158
      %p160 = scmp.ne.s32.totalorder %s149, %s152
      %p161 = scmp.eq.s32.totalorder %s20, 1
      %p162 = por %p160, %p161
      %p163 = scmp.ne.s32.totalorder %s152, %s153
      %p164 = scmp.eq.s32.totalorder %s20, 0
      %p165 = por %p163, %p164
      %p166 = scmp.ne.s32.totalorder %s152, %s153
      %p167 = scmp.eq.s32.totalorder %s21, 1
      %p168 = por %p166, %p167
      %p170 = scmp.ne.s32.totalorder %s153, %s169
      %p171 = scmp.eq.s32.totalorder %s21, 0
      %p172 = por %p170, %p171
      %p173 = scmp.le.s32.totalorder 1, %s15
      %p174 = scmp.lt.s32.totalorder %s15, 3
      %p175 = pnand %p173, %p174
      %p176 = pneg %p175
      // Predicated region
      $region9: #{tpu_custom_call.1} parent=5 // pred_check
        _
      $region10: #{tpu_custom_call.1} parent=5 // pred_check_branch
        %178 = sbr.rel (%p175) target = $region12
      $region11: #{tpu_custom_call.1} parent=5 // pred_region
        %s179 = ssub.s32 %s15, 1
        // Predicated region
        $region13: #{tpu_custom_call.1} parent=11 // pred_check
          %p180 = pneg %p76
        $region14: #{tpu_custom_call.1} parent=11 // pred_check_branch
          %182 = sbr.rel (%p180) target = $region16
        $region15: #{tpu_custom_call.1} parent=11 // pred_region
          _
        $region16: #{tpu_custom_call.1} parent=11 // pred_fallthru
          _
        // Predicated region
        $region17: #{tpu_custom_call.1} parent=11 // pred_check
          %p183 = pneg %p97
        $region18: #{tpu_custom_call.1} parent=11 // pred_check_branch
          %185 = sbr.rel (%p183) target = $region20
        $region19: #{tpu_custom_call.1} parent=11 // pred_region
          _
        $region20: #{tpu_custom_call.1} parent=11 // pred_fallthru
          _
        // Predicated region
        $region21: #{tpu_custom_call.1} parent=11 // pred_check
          %p186 = pneg %p118
        $region22: #{tpu_custom_call.1} parent=11 // pred_check_branch
          %188 = sbr.rel (%p186) target = $region24
        $region23: #{tpu_custom_call.1} parent=11 // pred_region
          _
        $region24: #{tpu_custom_call.1} parent=11 // pred_fallthru
          _
        // Predicated region
        $region25: #{tpu_custom_call.1} parent=11 // pred_check
          %p189 = pneg %p139
        $region26: #{tpu_custom_call.1} parent=11 // pred_check_branch
          %191 = sbr.rel (%p189) target = $region28
        $region27: #{tpu_custom_call.1} parent=11 // pred_region
          _
        $region28: #{tpu_custom_call.1} parent=11 // pred_fallthru
          _
      $region12: #{tpu_custom_call.1} parent=5 // pred_fallthru
        _
      %p192 = scmp.lt.s32.totalorder %s15, 2
      // Predicated region
      $region29: #{tpu_custom_call.1} parent=5 // pred_check
        %p193 = pneg %p192
      $region30: #{tpu_custom_call.1} parent=5 // pred_check_branch
        %195 = sbr.rel (%p193) target = $region32
      $region31: #{tpu_custom_call.1} parent=5 // pred_region
        // Predicated region
        $region33: #{tpu_custom_call.1} parent=31 // pred_check
          %p196 = pneg %p49
        $region34: #{tpu_custom_call.1} parent=31 // pred_check_branch
          %198 = sbr.rel (%p196) target = $region36
        $region35: #{tpu_custom_call.1} parent=31 // pred_region
          %p199 = scmp.lt.s32.totalorder %s22, 1
          %s200 = scalar_select %p199, %s22, 1
          %p201 = scmp.lt.s32.totalorder %s23, 0
          %s202 = scalar_select %p201, %s23, 0
          %s203 = sadd.s32 %s202, %s200
          %s204 = smul.addr %s203, 4
          %s205 = scalar_lea.vmem %s0, %s204
        $region36: #{tpu_custom_call.1} parent=31 // pred_fallthru
          _
      $region32: #{tpu_custom_call.1} parent=5 // pred_fallthru
        _
      %p206 = scmp.le.s32.totalorder 1, %s15
      %p207 = scmp.lt.s32.totalorder %s15, 3
      %p208 = pnand %p206, %p207
      %p209 = pneg %p208
      // Predicated region
      $region37: #{tpu_custom_call.1} parent=5 // pred_check
        _
      $region38: #{tpu_custom_call.1} parent=5 // pred_check_branch
        %211 = sbr.rel (%p208) target = $region40
      $region39: #{tpu_custom_call.1} parent=5 // pred_region
        %s212 = ssub.s32 %s15, 1
        %p213 = scmp.lt.s32.totalorder %s24, 1
        %s214 = scalar_select %p213, %s24, 1
        %p215 = scmp.lt.s32.totalorder %s25, 0
        %s216 = scalar_select %p215, %s25, 0
        %s217 = sadd.s32 %s216, %s214
        %s218 = smul.addr %s217, 4
        %s219 = scalar_lea.vmem %s0, %s218
        %p220 = pneg %p55
        %p221 = pneg %p52
        %p222 = pneg %p76
        %p223 = pneg %p73
        %p224 = pneg %p97
        %p225 = pneg %p94
        %p226 = pneg %p118
        %p227 = pneg %p115
        %p228 = pneg %p139
        %p229 = pneg %p136
        %p230 = pneg %p165
        %p231 = pneg %p162
        %s232 = sand.u32 %s152, 1
        %s233 = scalar_lea.sflag [#allocation5], %s232
        %s234 = sand.u32 %s152, 1
        %s235 = smul.addr %s234, 8
        %s236 = scalar_lea.vmem [#allocation4], %s235
        %p237 = scmp.lt.s32.totalorder %s24, 1
        %s238 = scalar_select %p237, %s24, 1
        %p239 = scmp.lt.s32.totalorder %s25, 0
        %s240 = scalar_select %p239, %s25, 0
        %s241 = sadd.s32 %s240, %s238
        %s242 = smul.addr %s241, 4
        %s243 = scalar_lea.vmem %s0, %s242
        %p244 = scmp.eq.s32.totalorder %s25, 0
        // Predicated region
        $region41: #{tpu_custom_call.1} parent=39 // pred_check
          %p245 = pneg %p244
        $region42: #{tpu_custom_call.1} parent=39 // pred_check_branch
          %247 = sbr.rel (%p245) target = $region44
        $region43: #{tpu_custom_call.1} parent=39 // pred_region
          %248 = vst [vmem:[#allocation2] sm:$0xff] 0.0
          %249 = vst [vmem:[#allocation2 + $0x8] sm:$0xff] 0.0
          %250 = vst [vmem:[#allocation2 + $0x10] sm:$0xff] 0.0
          %251 = vst [vmem:[#allocation2 + $0x18] sm:$0xff] 0.0
          %252 = vst [vmem:[#allocation2 + $0x20] sm:$0xff] 0.0
          %253 = vst [vmem:[#allocation2 + $0x28] sm:$0xff] 0.0
          %254 = vst [vmem:[#allocation2 + $0x30] sm:$0xff] 0.0
          %255 = vst [vmem:[#allocation2 + $0x38] sm:$0xff] 0.0
          %256 = vst [vmem:[#allocation2 + $0x40] sm:$0xff] 0.0
          %257 = vst [vmem:[#allocation2 + $0x48] sm:$0xff] 0.0
          %258 = vst [vmem:[#allocation2 + $0x50] sm:$0xff] 0.0
          %259 = vst [vmem:[#allocation2 + $0x58] sm:$0xff] 0.0
          %260 = vst [vmem:[#allocation2 + $0x60] sm:$0xff] 0.0
          %261 = vst [vmem:[#allocation2 + $0x68] sm:$0xff] 0.0
          %262 = vst [vmem:[#allocation2 + $0x70] sm:$0xff] 0.0
          %263 = vst [vmem:[#allocation2 + $0x78] sm:$0xff] 0.0
        $region44: #{tpu_custom_call.1} parent=39 // pred_fallthru
          _
        %v264 = vld [vmem:[%s243] sm:$0x7]
        %v265 = vld [vmem:[%s1] sm:$0x7]
        %v266 = vld [vmem:[%s2] sm:$0xff]
        %v267 = vld [vmem:[%s2 + $0x8] sm:$0xff]
        %v268 = vld [vmem:[%s2 + $0x10] sm:$0xff]
        %v269 = vld [vmem:[%s2 + $0x18] sm:$0xff]
        %v270 = vld [vmem:[%s2 + $0x20] sm:$0xff]
        %v271 = vld [vmem:[%s2 + $0x28] sm:$0xff]
        %v272 = vld [vmem:[%s2 + $0x30] sm:$0xff]
        %v273 = vld [vmem:[%s2 + $0x38] sm:$0xff]
        %v274 = vld [vmem:[%s2 + $0x40] sm:$0xff]
        %v275 = vld [vmem:[%s2 + $0x48] sm:$0xff]
        %v276 = vld [vmem:[%s2 + $0x50] sm:$0xff]
        %v277 = vld [vmem:[%s2 + $0x58] sm:$0xff]
        %v278 = vld [vmem:[%s2 + $0x60] sm:$0xff]
        %v279 = vld [vmem:[%s2 + $0x68] sm:$0xff]
        %v280 = vld [vmem:[%s2 + $0x70] sm:$0xff]
        %v281 = vld [vmem:[%s2 + $0x78] sm:$0xff]
        %283 = vset.pattern.permute.xlu0 0
        %284 = vperm.xlu0 %283, %v266
        %v285 = vpop.permute.xlu0 %284
        %288 = vset.pattern.permute.xlu0 0
        %289 = vperm.xlu0 %288, %v267
        %v290 = vpop.permute.xlu0 %289
        %293 = vset.pattern.permute.xlu0 0
        %294 = vperm.xlu0 %293, %v268
        %v295 = vpop.permute.xlu0 %294
        %298 = vset.pattern.permute.xlu0 0
        %299 = vperm.xlu0 %298, %v269
        %v300 = vpop.permute.xlu0 %299
        %303 = vset.pattern.permute.xlu0 0
        %304 = vperm.xlu0 %303, %v270
        %v305 = vpop.permute.xlu0 %304
        %308 = vset.pattern.permute.xlu0 0
        %309 = vperm.xlu0 %308, %v271
        %v310 = vpop.permute.xlu0 %309
        %313 = vset.pattern.permute.xlu0 0
        %314 = vperm.xlu0 %313, %v272
        %v315 = vpop.permute.xlu0 %314
        %318 = vset.pattern.permute.xlu0 0
        %319 = vperm.xlu0 %318, %v273
        %v320 = vpop.permute.xlu0 %319
        %323 = vset.pattern.permute.xlu0 0
        %324 = vperm.xlu0 %323, %v274
        %v325 = vpop.permute.xlu0 %324
        %328 = vset.pattern.permute.xlu0 0
        %329 = vperm.xlu0 %328, %v275
        %v330 = vpop.permute.xlu0 %329
        %333 = vset.pattern.permute.xlu0 0
        %334 = vperm.xlu0 %333, %v276
        %v335 = vpop.permute.xlu0 %334
        %338 = vset.pattern.permute.xlu0 0
        %339 = vperm.xlu0 %338, %v277
        %v340 = vpop.permute.xlu0 %339
        %343 = vset.pattern.permute.xlu0 0
        %344 = vperm.xlu0 %343, %v278
        %v345 = vpop.permute.xlu0 %344
        %348 = vset.pattern.permute.xlu0 0
        %349 = vperm.xlu0 %348, %v279
        %v350 = vpop.permute.xlu0 %349
        %353 = vset.pattern.permute.xlu0 0
        %354 = vperm.xlu0 %353, %v280
        %v355 = vpop.permute.xlu0 %354
        %358 = vset.pattern.permute.xlu0 0
        %359 = vperm.xlu0 %358, %v281
        %v360 = vpop.permute.xlu0 %359
        %362 = vxpose.xlu0.b32.start [1/16] %v265, 128
        %363 = vxpose.xlu0.b32.cont [2/16] 0.0, 128
        %364 = vxpose.xlu0.b32.cont [3/16] 0.0, 128
        %365 = vxpose.xlu0.b32.cont [4/16] 0.0, 128
        %366 = vxpose.xlu0.b32.cont [5/16] 0.0, 128
        %367 = vxpose.xlu0.b32.cont [6/16] 0.0, 128
        %368 = vxpose.xlu0.b32.cont [7/16] 0.0, 128
        %369 = vxpose.xlu0.b32.cont [8/16] 0.0, 128
        %370 = vxpose.xlu0.b32.cont [9/16] 0.0, 128
        %371 = vxpose.xlu0.b32.cont [10/16] 0.0, 128
        %372 = vxpose.xlu0.b32.cont [11/16] 0.0, 128
        %373 = vxpose.xlu0.b32.cont [12/16] 0.0, 128
        %374 = vxpose.xlu0.b32.cont [13/16] 0.0, 128
        %375 = vxpose.xlu0.b32.cont [14/16] 0.0, 128
        %376 = vxpose.xlu0.b32.cont [15/16] 0.0, 128
        %377 = vxpose.xlu0.b32.end [16/16] 0.0, 128
        %v378 = vpop.trf.xlu0
        %v379 = vpop.trf.xlu0
        %v380 = vpop.trf.xlu0
        %v381 = vpop.trf.xlu0
        %v382 = vpop.trf.xlu0
        %v383 = vpop.trf.xlu0
        %v384 = vpop.trf.xlu0
        %v385 = vpop.trf.xlu0
        %v386 = vpop.trf.xlu0
        %v387 = vpop.trf.xlu0
        %v388 = vpop.trf.xlu0
        %v389 = vpop.trf.xlu0
        %v390 = vpop.trf.xlu0
        %v391 = vpop.trf.xlu0
        %v392 = vpop.trf.xlu0
        %v393 = vpop.trf.xlu0
        %vm394 = vcmask 23552
        %v396 = vsel %vm394, %v378, 0
        %v399 = vsel %vm394, %v379, 0
        %v402 = vsel %vm394, %v380, 0
        %v405 = vsel %vm394, %v381, 0
        %v408 = vsel %vm394, %v382, 0
        %v411 = vsel %vm394, %v383, 0
        %v414 = vsel %vm394, %v384, 0
        %v417 = vsel %vm394, %v385, 0
        %v420 = vsel %vm394, %v386, 0
        %v423 = vsel %vm394, %v387, 0
        %v426 = vsel %vm394, %v388, 0
        %v429 = vsel %vm394, %v389, 0
        %v432 = vsel %vm394, %v390, 0
        %v435 = vsel %vm394, %v391, 0
        %v438 = vsel %vm394, %v392, 0
        %v441 = vsel %vm394, %v393, 0
        %vm443 = vcmask 1042432
        %v445 = vsel %vm443, %v264, 0
        %447 = vmatprep.subr.mxu0 0.0
        %v448 = vand.u32 %v445, 4294901760
        %449 = vmatpush1.msra.mxu0 %v448
        %450 = vmatprep.subr.mxu0 0.0
        %451 = vmatpush1.msra.mxu0 0.0
        %452 = vmatprep.subr.mxu0 0.0
        %453 = vmatpush1.msra.mxu0 0.0
        %454 = vmatprep.subr.mxu0 0.0
        %455 = vmatpush1.msra.mxu0 0.0
        %456 = vmatprep.subr.mxu0 0.0
        %457 = vmatpush1.msra.mxu0 0.0
        %458 = vmatprep.subr.mxu0 0.0
        %459 = vmatpush1.msra.mxu0 0.0
        %460 = vmatprep.subr.mxu0 0.0
        %461 = vmatpush1.msra.mxu0 0.0
        %462 = vmatprep.subr.mxu0 0.0
        %463 = vmatpush1.msra.mxu0 0.0
        %464 = vmatprep.subr.mxu0 0.0
        %465 = vmatpush1.msra.mxu0 0.0
        %466 = vmatprep.subr.mxu0 0.0
        %467 = vmatpush1.msra.mxu0 0.0
        %468 = vmatprep.subr.mxu0 0.0
        %469 = vmatpush1.msra.mxu0 0.0
        %470 = vmatprep.subr.mxu0 0.0
        %471 = vmatpush1.msra.mxu0 0.0
        %472 = vmatprep.subr.mxu0 0.0
        %473 = vmatpush1.msra.mxu0 0.0
        %474 = vmatprep.subr.mxu0 0.0
        %475 = vmatpush1.msra.mxu0 0.0
        %476 = vmatprep.subr.mxu0 0.0
        %477 = vmatpush1.msra.mxu0 0.0
        %478 = vmatprep.subr.mxu0 0.0
        %479 = vmatpush1.msra.mxu0 0.0
        %480 = vmatprep.subr.mxu0 0.0
        %481 = vmatpush1.msra.mxu0 0.0
        %482 = vmatprep.subr.mxu0 0.0
        %483 = vmatpush1.msra.mxu0 0.0
        %484 = vmatprep.subr.mxu0 0.0
        %485 = vmatpush1.msra.mxu0 0.0
        %486 = vmatprep.subr.mxu0 0.0
        %487 = vmatpush1.msra.mxu0 0.0
        %488 = vmatprep.subr.mxu0 0.0
        %489 = vmatpush1.msra.mxu0 0.0
        %490 = vmatprep.subr.mxu0 0.0
        %491 = vmatpush1.msra.mxu0 0.0
        %492 = vmatprep.subr.mxu0 0.0
        %493 = vmatpush1.msra.mxu0 0.0
        %494 = vmatprep.subr.mxu0 0.0
        %495 = vmatpush1.msra.mxu0 0.0
        %496 = vmatprep.subr.mxu0 0.0
        %497 = vmatpush1.msra.mxu0 0.0
        %498 = vmatprep.subr.mxu0 0.0
        %499 = vmatpush1.msra.mxu0 0.0
        %500 = vmatprep.subr.mxu0 0.0
        %501 = vmatpush1.msra.mxu0 0.0
        %502 = vmatprep.subr.mxu0 0.0
        %503 = vmatpush1.msra.mxu0 0.0
        %504 = vmatprep.subr.mxu0 0.0
        %505 = vmatpush1.msra.mxu0 0.0
        %506 = vmatprep.subr.mxu0 0.0
        %507 = vmatpush1.msra.mxu0 0.0
        %508 = vmatprep.subr.mxu0 0.0
        %509 = vmatpush1.msra.mxu0 0.0
        %510 = vmatprep.subr.mxu0 0.0
        %511 = vmatpush1.msra.mxu0 0.0
        %512 = vmatprep.mubr.f32.mxu0 0.0
        %v513 = vand.u32 %v396, 4294901760
        %v514 = vsub.f32 %v396, %v513
        %v515 = vand.u32 %v514, 4294901760
        %v516 = vsub.f32 %v514, %v515
        %v517 = vand.u32 %v516, 4294901760
        %518 = vmatmul.mubr.f32.gmra.mrb[0].mxu0 %v517
        %v519 = vpop.f32.mrb[0].mxu0
        %v520 = vadd.f32 %v285, %v519
        %v521 = vpop.f32.mrb[0].mxu0
        %522 = vmatprep.mubr.f32.mxu0 0.0
        %v523 = vand.u32 %v399, 4294901760
        %v524 = vsub.f32 %v399, %v523
        %v525 = vand.u32 %v524, 4294901760
        %v526 = vsub.f32 %v524, %v525
        %v527 = vand.u32 %v526, 4294901760
        %528 = vmatmul.mubr.f32.gmra.mrb[0].mxu0 %v527
        %v529 = vpop.f32.mrb[0].mxu0
        %v530 = vadd.f32 %v290, %v529
        %v531 = vpop.f32.mrb[0].mxu0
        %532 = vmatprep.mubr.f32.mxu0 0.0
        %v533 = vand.u32 %v402, 4294901760
        %v534 = vsub.f32 %v402, %v533
        %v535 = vand.u32 %v534, 4294901760
        %v536 = vsub.f32 %v534, %v535
        %v537 = vand.u32 %v536, 4294901760
        %538 = vmatmul.mubr.f32.gmra.mrb[0].mxu0 %v537
        %v539 = vpop.f32.mrb[0].mxu0
        %v540 = vadd.f32 %v295, %v539
        %v541 = vpop.f32.mrb[0].mxu0
        %542 = vmatprep.mubr.f32.mxu0 0.0
        %v543 = vand.u32 %v405, 4294901760
        %v544 = vsub.f32 %v405, %v543
        %v545 = vand.u32 %v544, 4294901760
        %v546 = vsub.f32 %v544, %v545
        %v547 = vand.u32 %v546, 4294901760
        %548 = vmatmul.mubr.f32.gmra.mrb[0].mxu0 %v547
        %v549 = vpop.f32.mrb[0].mxu0
        %v550 = vadd.f32 %v300, %v549
        %v551 = vpop.f32.mrb[0].mxu0
        %552 = vmatprep.mubr.f32.mxu0 0.0
        %v553 = vand.u32 %v408, 4294901760
        %v554 = vsub.f32 %v408, %v553
        %v555 = vand.u32 %v554, 4294901760
        %v556 = vsub.f32 %v554, %v555
        %v557 = vand.u32 %v556, 4294901760
        %558 = vmatmul.mubr.f32.gmra.mrb[0].mxu0 %v557
        %v559 = vpop.f32.mrb[0].mxu0
        %v560 = vadd.f32 %v305, %v559
        %v561 = vpop.f32.mrb[0].mxu0
        %562 = vmatprep.mubr.f32.mxu0 0.0
        %v563 = vand.u32 %v411, 4294901760
        %v564 = vsub.f32 %v411, %v563
        %v565 = vand.u32 %v564, 4294901760
        %v566 = vsub.f32 %v564, %v565
        %v567 = vand.u32 %v566, 4294901760
        %568 = vmatmul.mubr.f32.gmra.mrb[0].mxu0 %v567
        %v569 = vpop.f32.mrb[0].mxu0
        %v570 = vadd.f32 %v310, %v569
        %v571 = vpop.f32.mrb[0].mxu0
        %572 = vmatprep.mubr.f32.mxu0 0.0
        %v573 = vand.u32 %v414, 4294901760
        %v574 = vsub.f32 %v414, %v573
        %v575 = vand.u32 %v574, 4294901760
        %v576 = vsub.f32 %v574, %v575
        %v577 = vand.u32 %v576, 4294901760
        %578 = vmatmul.mubr.f32.gmra.mrb[0].mxu0 %v577
        %v579 = vpop.f32.mrb[0].mxu0
        %v580 = vadd.f32 %v315, %v579
        %v581 = vpop.f32.mrb[0].mxu0
        %582 = vmatprep.mubr.f32.mxu0 0.0
        %v583 = vand.u32 %v417, 4294901760
        %v584 = vsub.f32 %v417, %v583
        %v585 = vand.u32 %v584, 4294901760
        %v586 = vsub.f32 %v584, %v585
        %v587 = vand.u32 %v586, 4294901760
        %588 = vmatmul.mubr.f32.gmra.mrb[0].mxu0 %v587
        %v589 = vpop.f32.mrb[0].mxu0
        %v590 = vadd.f32 %v320, %v589
        %v591 = vpop.f32.mrb[0].mxu0
        %592 = vmatprep.mubr.f32.mxu0 0.0
        %v593 = vand.u32 %v420, 4294901760
        %v594 = vsub.f32 %v420, %v593
        %v595 = vand.u32 %v594, 4294901760
        %v596 = vsub.f32 %v594, %v595
        %v597 = vand.u32 %v596, 4294901760
        %598 = vmatmul.mubr.f32.gmra.mrb[0].mxu0 %v597
        %v599 = vpop.f32.mrb[0].mxu0
        %v600 = vadd.f32 %v325, %v599
        %v601 = vpop.f32.mrb[0].mxu0
        %602 = vmatprep.mubr.f32.mxu0 0.0
        %v603 = vand.u32 %v423, 4294901760
        %v604 = vsub.f32 %v423, %v603
        %v605 = vand.u32 %v604, 4294901760
        %v606 = vsub.f32 %v604, %v605
        %v607 = vand.u32 %v606, 4294901760
        %608 = vmatmul.mubr.f32.gmra.mrb[0].mxu0 %v607
        %v609 = vpop.f32.mrb[0].mxu0
        %v610 = vadd.f32 %v330, %v609
        %v611 = vpop.f32.mrb[0].mxu0
        %612 = vmatprep.mubr.f32.mxu0 0.0
        %v613 = vand.u32 %v426, 4294901760
        %v614 = vsub.f32 %v426, %v613
        %v615 = vand.u32 %v614, 4294901760
        %v616 = vsub.f32 %v614, %v615
        %v617 = vand.u32 %v616, 4294901760
        %618 = vmatmul.mubr.f32.gmra.mrb[0].mxu0 %v617
        %v619 = vpop.f32.mrb[0].mxu0
        %v620 = vadd.f32 %v335, %v619
        %v621 = vpop.f32.mrb[0].mxu0
        %622 = vmatprep.mubr.f32.mxu0 0.0
        %v623 = vand.u32 %v429, 4294901760
        %v624 = vsub.f32 %v429, %v623
        %v625 = vand.u32 %v624, 4294901760
        %v626 = vsub.f32 %v624, %v625
        %v627 = vand.u32 %v626, 4294901760
        %628 = vmatmul.mubr.f32.gmra.mrb[0].mxu0 %v627
        %v629 = vpop.f32.mrb[0].mxu0
        %v630 = vadd.f32 %v340, %v629
        %v631 = vpop.f32.mrb[0].mxu0
        %632 = vmatprep.mubr.f32.mxu0 0.0
        %v633 = vand.u32 %v432, 4294901760
        %v634 = vsub.f32 %v432, %v633
        %v635 = vand.u32 %v634, 4294901760
        %v636 = vsub.f32 %v634, %v635
        %v637 = vand.u32 %v636, 4294901760
        %638 = vmatmul.mubr.f32.gmra.mrb[0].mxu0 %v637
        %v639 = vpop.f32.mrb[0].mxu0
        %v640 = vadd.f32 %v345, %v639
        %v641 = vpop.f32.mrb[0].mxu0
        %642 = vmatprep.mubr.f32.mxu0 0.0
        %v643 = vand.u32 %v435, 4294901760
        %v644 = vsub.f32 %v435, %v643
        %v645 = vand.u32 %v644, 4294901760
        %v646 = vsub.f32 %v644, %v645
        %v647 = vand.u32 %v646, 4294901760
        %648 = vmatmul.mubr.f32.gmra.mrb[0].mxu0 %v647
        %v649 = vpop.f32.mrb[0].mxu0
        %v650 = vadd.f32 %v350, %v649
        %v651 = vpop.f32.mrb[0].mxu0
        %652 = vmatprep.mubr.f32.mxu0 0.0
        %v653 = vand.u32 %v438, 4294901760
        %v654 = vsub.f32 %v438, %v653
        %v655 = vand.u32 %v654, 4294901760
        %v656 = vsub.f32 %v654, %v655
        %v657 = vand.u32 %v656, 4294901760
        %658 = vmatmul.mubr.f32.gmra.mrb[0].mxu0 %v657
        %v659 = vpop.f32.mrb[0].mxu0
        %v660 = vadd.f32 %v355, %v659
        %v661 = vpop.f32.mrb[0].mxu0
        %662 = vmatprep.mubr.f32.mxu0 0.0
        %v663 = vand.u32 %v441, 4294901760
        %v664 = vsub.f32 %v441, %v663
        %v665 = vand.u32 %v664, 4294901760
        %v666 = vsub.f32 %v664, %v665
        %v667 = vand.u32 %v666, 4294901760
        %668 = vmatmul.mubr.f32.gmra.mrb[0].mxu0 %v667
        %v669 = vpop.f32.mrb[0].mxu0
        %v670 = vadd.f32 %v360, %v669
        %v671 = vpop.f32.mrb[0].mxu0
        %672 = vdwg.mxu0
        %673 = vmatprep.subr.mxu0 0.0
        %v674 = vand.u32 %v445, 4294901760
        %v675 = vsub.f32 %v445, %v674
        %v676 = vand.u32 %v675, 4294901760
        %v677 = vsub.f32 %v675, %v676
        %v678 = vand.u32 %v677, 4294901760
        %679 = vmatpush1.msra.mxu0 %v678
        %680 = vmatprep.subr.mxu0 0.0
        %681 = vmatpush1.msra.mxu0 0.0
        %682 = vmatprep.subr.mxu0 0.0
        %683 = vmatpush1.msra.mxu0 0.0
        %684 = vmatprep.subr.mxu0 0.0
        %685 = vmatpush1.msra.mxu0 0.0
        %686 = vmatprep.subr.mxu0 0.0
        %687 = vmatpush1.msra.mxu0 0.0
        %688 = vmatprep.subr.mxu0 0.0
        %689 = vmatpush1.msra.mxu0 0.0
        %690 = vmatprep.subr.mxu0 0.0
        %691 = vmatpush1.msra.mxu0 0.0
        %692 = vmatprep.subr.mxu0 0.0
        %693 = vmatpush1.msra.mxu0 0.0
        %694 = vmatprep.subr.mxu0 0.0
        %695 = vmatpush1.msra.mxu0 0.0
        %696 = vmatprep.subr.mxu0 0.0
        %697 = vmatpush1.msra.mxu0 0.0
        %698 = vmatprep.subr.mxu0 0.0
        %699 = vmatpush1.msra.mxu0 0.0
        %700 = vmatprep.subr.mxu0 0.0
        %701 = vmatpush1.msra.mxu0 0.0
        %702 = vmatprep.subr.mxu0 0.0
        %703 = vmatpush1.msra.mxu0 0.0
        %704 = vmatprep.subr.mxu0 0.0
        %705 = vmatpush1.msra.mxu0 0.0
        %706 = vmatprep.subr.mxu0 0.0
        %707 = vmatpush1.msra.mxu0 0.0
        %708 = vmatprep.subr.mxu0 0.0
        %709 = vmatpush1.msra.mxu0 0.0
        %710 = vmatprep.subr.mxu0 0.0
        %711 = vmatpush1.msra.mxu0 0.0
        %712 = vmatprep.subr.mxu0 0.0
        %713 = vmatpush1.msra.mxu0 0.0
        %714 = vmatprep.subr.mxu0 0.0
        %715 = vmatpush1.msra.mxu0 0.0
        %716 = vmatprep.subr.mxu0 0.0
        %717 = vmatpush1.msra.mxu0 0.0
        %718 = vmatprep.subr.mxu0 0.0
        %719 = vmatpush1.msra.mxu0 0.0
        %720 = vmatprep.subr.mxu0 0.0
        %721 = vmatpush1.msra.mxu0 0.0
        %722 = vmatprep.subr.mxu0 0.0
        %723 = vmatpush1.msra.mxu0 0.0
        %724 = vmatprep.subr.mxu0 0.0
        %725 = vmatpush1.msra.mxu0 0.0
        %726 = vmatprep.subr.mxu0 0.0
        %727 = vmatpush1.msra.mxu0 0.0
        %728 = vmatprep.subr.mxu0 0.0
        %729 = vmatpush1.msra.mxu0 0.0
        %730 = vmatprep.subr.mxu0 0.0
        %731 = vmatpush1.msra.mxu0 0.0
        %732 = vmatprep.subr.mxu0 0.0
        %733 = vmatpush1.msra.mxu0 0.0
        %734 = vmatprep.subr.mxu0 0.0
        %735 = vmatpush1.msra.mxu0 0.0
        %736 = vmatprep.subr.mxu0 0.0
        %737 = vmatpush1.msra.mxu0 0.0
        %738 = vmatprep.subr.mxu0 0.0
        %739 = vmatpush1.msra.mxu0 0.0
        %740 = vmatprep.subr.mxu0 0.0
        %741 = vmatpush1.msra.mxu0 0.0
        %742 = vmatprep.mubr.f32.mxu0 0.0
        %v743 = vand.u32 %v396, 4294901760
        %744 = vmatmul.mubr.f32.gmra.mrb[0].mxu0 %v743
        %v745 = vpop.f32.mrb[0].mxu0
        %v746 = vadd.f32 %v520, %v745
        %v747 = vpop.f32.mrb[0].mxu0
        %748 = vmatprep.mubr.f32.mxu0 0.0
        %v749 = vand.u32 %v399, 4294901760
        %750 = vmatmul.mubr.f32.gmra.mrb[0].mxu0 %v749
        %v751 = vpop.f32.mrb[0].mxu0
        %v752 = vadd.f32 %v530, %v751
        %v753 = vpop.f32.mrb[0].mxu0
        %754 = vmatprep.mubr.f32.mxu0 0.0
        %v755 = vand.u32 %v402, 4294901760
        %756 = vmatmul.mubr.f32.gmra.mrb[0].mxu0 %v755
        %v757 = vpop.f32.mrb[0].mxu0
        %v758 = vadd.f32 %v540, %v757
        %v759 = vpop.f32.mrb[0].mxu0
        %760 = vmatprep.mubr.f32.mxu0 0.0
        %v761 = vand.u32 %v405, 4294901760
        %762 = vmatmul.mubr.f32.gmra.mrb[0].mxu0 %v761
        %v763 = vpop.f32.mrb[0].mxu0
        %v764 = vadd.f32 %v550, %v763
        %v765 = vpop.f32.mrb[0].mxu0
        %766 = vmatprep.mubr.f32.mxu0 0.0
        %v767 = vand.u32 %v408, 4294901760
        %768 = vmatmul.mubr.f32.gmra.mrb[0].mxu0 %v767
        %v769 = vpop.f32.mrb[0].mxu0
        %v770 = vadd.f32 %v560, %v769
        %v771 = vpop.f32.mrb[0].mxu0
        %772 = vmatprep.mubr.f32.mxu0 0.0
        %v773 = vand.u32 %v411, 4294901760
        %774 = vmatmul.mubr.f32.gmra.mrb[0].mxu0 %v773
        %v775 = vpop.f32.mrb[0].mxu0
        %v776 = vadd.f32 %v570, %v775
        %v777 = vpop.f32.mrb[0].mxu0
        %778 = vmatprep.mubr.f32.mxu0 0.0
        %v779 = vand.u32 %v414, 4294901760
        %780 = vmatmul.mubr.f32.gmra.mrb[0].mxu0 %v779
        %v781 = vpop.f32.mrb[0].mxu0
        %v782 = vadd.f32 %v580, %v781
        %v783 = vpop.f32.mrb[0].mxu0
        %784 = vmatprep.mubr.f32.mxu0 0.0
        %v785 = vand.u32 %v417, 4294901760
        %786 = vmatmul.mubr.f32.gmra.mrb[0].mxu0 %v785
        %v787 = vpop.f32.mrb[0].mxu0
        %v788 = vadd.f32 %v590, %v787
        %v789 = vpop.f32.mrb[0].mxu0
        %790 = vmatprep.mubr.f32.mxu0 0.0
        %v791 = vand.u32 %v420, 4294901760
        %792 = vmatmul.mubr.f32.gmra.mrb[0].mxu0 %v791
        %v793 = vpop.f32.mrb[0].mxu0
        %v794 = vadd.f32 %v600, %v793
        %v795 = vpop.f32.mrb[0].mxu0
        %796 = vmatprep.mubr.f32.mxu0 0.0
        %v797 = vand.u32 %v423, 4294901760
        %798 = vmatmul.mubr.f32.gmra.mrb[0].mxu0 %v797
        %v799 = vpop.f32.mrb[0].mxu0
        %v800 = vadd.f32 %v610, %v799
        %v801 = vpop.f32.mrb[0].mxu0
        %802 = vmatprep.mubr.f32.mxu0 0.0
        %v803 = vand.u32 %v426, 4294901760
        %804 = vmatmul.mubr.f32.gmra.mrb[0].mxu0 %v803
        %v805 = vpop.f32.mrb[0].mxu0
        %v806 = vadd.f32 %v620, %v805
        %v807 = vpop.f32.mrb[0].mxu0
        %808 = vmatprep.mubr.f32.mxu0 0.0
        %v809 = vand.u32 %v429, 4294901760
        %810 = vmatmul.mubr.f32.gmra.mrb[0].mxu0 %v809
        %v811 = vpop.f32.mrb[0].mxu0
        %v812 = vadd.f32 %v630, %v811
        %v813 = vpop.f32.mrb[0].mxu0
        %814 = vmatprep.mubr.f32.mxu0 0.0
        %v815 = vand.u32 %v432, 4294901760
        %816 = vmatmul.mubr.f32.gmra.mrb[0].mxu0 %v815
        %v817 = vpop.f32.mrb[0].mxu0
        %v818 = vadd.f32 %v640, %v817
        %v819 = vpop.f32.mrb[0].mxu0
        %820 = vmatprep.mubr.f32.mxu0 0.0
        %v821 = vand.u32 %v435, 4294901760
        %822 = vmatmul.mubr.f32.gmra.mrb[0].mxu0 %v821
        %v823 = vpop.f32.mrb[0].mxu0
        %v824 = vadd.f32 %v650, %v823
        %v825 = vpop.f32.mrb[0].mxu0
        %826 = vmatprep.mubr.f32.mxu0 0.0
        %v827 = vand.u32 %v438, 4294901760
        %828 = vmatmul.mubr.f32.gmra.mrb[0].mxu0 %v827
        %v829 = vpop.f32.mrb[0].mxu0
        %v830 = vadd.f32 %v660, %v829
        %v831 = vpop.f32.mrb[0].mxu0
        %832 = vmatprep.mubr.f32.mxu0 0.0
        %v833 = vand.u32 %v441, 4294901760
        %834 = vmatmul.mubr.f32.gmra.mrb[0].mxu0 %v833
        %v835 = vpop.f32.mrb[0].mxu0
        %v836 = vadd.f32 %v670, %v835
        %v837 = vpop.f32.mrb[0].mxu0
        %838 = vdwg.mxu0
        %839 = vmatprep.subr.mxu0 0.0
        %v840 = vand.u32 %v445, 4294901760
        %v841 = vsub.f32 %v445, %v840
        %842 = vmatpush1.msra.mxu0 %v841
        %843 = vmatprep.subr.mxu0 0.0
        %844 = vmatpush1.msra.mxu0 0.0
        %845 = vmatprep.subr.mxu0 0.0
        %846 = vmatpush1.msra.mxu0 0.0
        %847 = vmatprep.subr.mxu0 0.0
        %848 = vmatpush1.msra.mxu0 0.0
        %849 = vmatprep.subr.mxu0 0.0
        %850 = vmatpush1.msra.mxu0 0.0
        %851 = vmatprep.subr.mxu0 0.0
        %852 = vmatpush1.msra.mxu0 0.0
        %853 = vmatprep.subr.mxu0 0.0
        %854 = vmatpush1.msra.mxu0 0.0
        %855 = vmatprep.subr.mxu0 0.0
        %856 = vmatpush1.msra.mxu0 0.0
        %857 = vmatprep.subr.mxu0 0.0
        %858 = vmatpush1.msra.mxu0 0.0
        %859 = vmatprep.subr.mxu0 0.0
        %860 = vmatpush1.msra.mxu0 0.0
        %861 = vmatprep.subr.mxu0 0.0
        %862 = vmatpush1.msra.mxu0 0.0
        %863 = vmatprep.subr.mxu0 0.0
        %864 = vmatpush1.msra.mxu0 0.0
        %865 = vmatprep.subr.mxu0 0.0
        %866 = vmatpush1.msra.mxu0 0.0
        %867 = vmatprep.subr.mxu0 0.0
        %868 = vmatpush1.msra.mxu0 0.0
        %869 = vmatprep.subr.mxu0 0.0
        %870 = vmatpush1.msra.mxu0 0.0
        %871 = vmatprep.subr.mxu0 0.0
        %872 = vmatpush1.msra.mxu0 0.0
        %873 = vmatprep.subr.mxu0 0.0
        %874 = vmatpush1.msra.mxu0 0.0
        %875 = vmatprep.subr.mxu0 0.0
        %876 = vmatpush1.msra.mxu0 0.0
        %877 = vmatprep.subr.mxu0 0.0
        %878 = vmatpush1.msra.mxu0 0.0
        %879 = vmatprep.subr.mxu0 0.0
        %880 = vmatpush1.msra.mxu0 0.0
        %881 = vmatprep.subr.mxu0 0.0
        %882 = vmatpush1.msra.mxu0 0.0
        %883 = vmatprep.subr.mxu0 0.0
        %884 = vmatpush1.msra.mxu0 0.0
        %885 = vmatprep.subr.mxu0 0.0
        %886 = vmatpush1.msra.mxu0 0.0
        %887 = vmatprep.subr.mxu0 0.0
        %888 = vmatpush1.msra.mxu0 0.0
        %889 = vmatprep.subr.mxu0 0.0
        %890 = vmatpush1.msra.mxu0 0.0
        %891 = vmatprep.subr.mxu0 0.0
        %892 = vmatpush1.msra.mxu0 0.0
        %893 = vmatprep.subr.mxu0 0.0
        %894 = vmatpush1.msra.mxu0 0.0
        %895 = vmatprep.subr.mxu0 0.0
        %896 = vmatpush1.msra.mxu0 0.0
        %897 = vmatprep.subr.mxu0 0.0
        %898 = vmatpush1.msra.mxu0 0.0
        %899 = vmatprep.subr.mxu0 0.0
        %900 = vmatpush1.msra.mxu0 0.0
        %901 = vmatprep.subr.mxu0 0.0
        %902 = vmatpush1.msra.mxu0 0.0
        %903 = vmatprep.subr.mxu0 0.0
        %904 = vmatpush1.msra.mxu0 0.0
        %905 = vmatprep.mubr.f32.mxu0 0.0
        %v906 = vand.u32 %v396, 4294901760
        %v907 = vsub.f32 %v396, %v906
        %908 = vmatmul.mubr.f32.gmra.mrb[0].mxu0 %v907
        %v909 = vpop.f32.mrb[0].mxu0
        %v910 = vadd.f32 %v746, %v909
        %v911 = vpop.f32.mrb[0].mxu0
        %912 = vmatprep.mubr.f32.mxu0 0.0
        %v913 = vand.u32 %v399, 4294901760
        %v914 = vsub.f32 %v399, %v913
        %915 = vmatmul.mubr.f32.gmra.mrb[0].mxu0 %v914
        %v916 = vpop.f32.mrb[0].mxu0
        %v917 = vadd.f32 %v752, %v916
        %v918 = vpop.f32.mrb[0].mxu0
        %919 = vmatprep.mubr.f32.mxu0 0.0
        %v920 = vand.u32 %v402, 4294901760
        %v921 = vsub.f32 %v402, %v920
        %922 = vmatmul.mubr.f32.gmra.mrb[0].mxu0 %v921
        %v923 = vpop.f32.mrb[0].mxu0
        %v924 = vadd.f32 %v758, %v923
        %v925 = vpop.f32.mrb[0].mxu0
        %926 = vmatprep.mubr.f32.mxu0 0.0
        %v927 = vand.u32 %v405, 4294901760
        %v928 = vsub.f32 %v405, %v927
        %929 = vmatmul.mubr.f32.gmra.mrb[0].mxu0 %v928
        %v930 = vpop.f32.mrb[0].mxu0
        %v931 = vadd.f32 %v764, %v930
        %v932 = vpop.f32.mrb[0].mxu0
        %933 = vmatprep.mubr.f32.mxu0 0.0
        %v934 = vand.u32 %v408, 4294901760
        %v935 = vsub.f32 %v408, %v934
        %936 = vmatmul.mubr.f32.gmra.mrb[0].mxu0 %v935
        %v937 = vpop.f32.mrb[0].mxu0
        %v938 = vadd.f32 %v770, %v937
        %v939 = vpop.f32.mrb[0].mxu0
        %940 = vmatprep.mubr.f32.mxu0 0.0
        %v941 = vand.u32 %v411, 4294901760
        %v942 = vsub.f32 %v411, %v941
        %943 = vmatmul.mubr.f32.gmra.mrb[0].mxu0 %v942
        %v944 = vpop.f32.mrb[0].mxu0
        %v945 = vadd.f32 %v776, %v944
        %v946 = vpop.f32.mrb[0].mxu0
        %947 = vmatprep.mubr.f32.mxu0 0.0
        %v948 = vand.u32 %v414, 4294901760
        %v949 = vsub.f32 %v414, %v948
        %950 = vmatmul.mubr.f32.gmra.mrb[0].mxu0 %v949
        %v951 = vpop.f32.mrb[0].mxu0
        %v952 = vadd.f32 %v782, %v951
        %v953 = vpop.f32.mrb[0].mxu0
        %954 = vmatprep.mubr.f32.mxu0 0.0
        %v955 = vand.u32 %v417, 4294901760
        %v956 = vsub.f32 %v417, %v955
        %957 = vmatmul.mubr.f32.gmra.mrb[0].mxu0 %v956
        %v958 = vpop.f32.mrb[0].mxu0
        %v959 = vadd.f32 %v788, %v958
        %v960 = vpop.f32.mrb[0].mxu0
        %961 = vmatprep.mubr.f32.mxu0 0.0
        %v962 = vand.u32 %v420, 4294901760
        %v963 = vsub.f32 %v420, %v962
        %964 = vmatmul.mubr.f32.gmra.mrb[0].mxu0 %v963
        %v965 = vpop.f32.mrb[0].mxu0
        %v966 = vadd.f32 %v794, %v965
        %v967 = vpop.f32.mrb[0].mxu0
        %968 = vmatprep.mubr.f32.mxu0 0.0
        %v969 = vand.u32 %v423, 4294901760
        %v970 = vsub.f32 %v423, %v969
        %971 = vmatmul.mubr.f32.gmra.mrb[0].mxu0 %v970
        %v972 = vpop.f32.mrb[0].mxu0
        %v973 = vadd.f32 %v800, %v972
        %v974 = vpop.f32.mrb[0].mxu0
        %975 = vmatprep.mubr.f32.mxu0 0.0
        %v976 = vand.u32 %v426, 4294901760
        %v977 = vsub.f32 %v426, %v976
        %978 = vmatmul.mubr.f32.gmra.mrb[0].mxu0 %v977
        %v979 = vpop.f32.mrb[0].mxu0
        %v980 = vadd.f32 %v806, %v979
        %v981 = vpop.f32.mrb[0].mxu0
        %982 = vmatprep.mubr.f32.mxu0 0.0
        %v983 = vand.u32 %v429, 4294901760
        %v984 = vsub.f32 %v429, %v983
        %985 = vmatmul.mubr.f32.gmra.mrb[0].mxu0 %v984
        %v986 = vpop.f32.mrb[0].mxu0
        %v987 = vadd.f32 %v812, %v986
        %v988 = vpop.f32.mrb[0].mxu0
        %989 = vmatprep.mubr.f32.mxu0 0.0
        %v990 = vand.u32 %v432, 4294901760
        %v991 = vsub.f32 %v432, %v990
        %992 = vmatmul.mubr.f32.gmra.mrb[0].mxu0 %v991
        %v993 = vpop.f32.mrb[0].mxu0
        %v994 = vadd.f32 %v818, %v993
        %v995 = vpop.f32.mrb[0].mxu0
        %996 = vmatprep.mubr.f32.mxu0 0.0
        %v997 = vand.u32 %v435, 4294901760
        %v998 = vsub.f32 %v435, %v997
        %999 = vmatmul.mubr.f32.gmra.mrb[0].mxu0 %v998
        %v1000 = vpop.f32.mrb[0].mxu0
        %v1001 = vadd.f32 %v824, %v1000
        %v1002 = vpop.f32.mrb[0].mxu0
        %1003 = vmatprep.mubr.f32.mxu0 0.0
        %v1004 = vand.u32 %v438, 4294901760
        %v1005 = vsub.f32 %v438, %v1004
        %1006 = vmatmul.mubr.f32.gmra.mrb[0].mxu0 %v1005
        %v1007 = vpop.f32.mrb[0].mxu0
        %v1008 = vadd.f32 %v830, %v1007
        %v1009 = vpop.f32.mrb[0].mxu0
        %1010 = vmatprep.mubr.f32.mxu0 0.0
        %v1011 = vand.u32 %v441, 4294901760
        %v1012 = vsub.f32 %v441, %v1011
        %1013 = vmatmul.mubr.f32.gmra.mrb[0].mxu0 %v1012
        %v1014 = vpop.f32.mrb[0].mxu0
        %v1015 = vadd.f32 %v836, %v1014
        %v1016 = vpop.f32.mrb[0].mxu0
        %1017 = vdwg.mxu0
        %1018 = vmatprep.subr.mxu0 0.0
        %v1019 = vand.u32 %v445, 4294901760
        %1020 = vmatpush1.msra.mxu0 %v1019
        %1021 = vmatprep.subr.mxu0 0.0
        %1022 = vmatpush1.msra.mxu0 0.0
        %1023 = vmatprep.subr.mxu0 0.0
        %1024 = vmatpush1.msra.mxu0 0.0
        %1025 = vmatprep.subr.mxu0 0.0
        %1026 = vmatpush1.msra.mxu0 0.0
        %1027 = vmatprep.subr.mxu0 0.0
        %1028 = vmatpush1.msra.mxu0 0.0
        %1029 = vmatprep.subr.mxu0 0.0
        %1030 = vmatpush1.msra.mxu0 0.0
        %1031 = vmatprep.subr.mxu0 0.0
        %1032 = vmatpush1.msra.mxu0 0.0
        %1033 = vmatprep.subr.mxu0 0.0
        %1034 = vmatpush1.msra.mxu0 0.0
        %1035 = vmatprep.subr.mxu0 0.0
        %1036 = vmatpush1.msra.mxu0 0.0
        %1037 = vmatprep.subr.mxu0 0.0
        %1038 = vmatpush1.msra.mxu0 0.0
        %1039 = vmatprep.subr.mxu0 0.0
        %1040 = vmatpush1.msra.mxu0 0.0
        %1041 = vmatprep.subr.mxu0 0.0
        %1042 = vmatpush1.msra.mxu0 0.0
        %1043 = vmatprep.subr.mxu0 0.0
        %1044 = vmatpush1.msra.mxu0 0.0
        %1045 = vmatprep.subr.mxu0 0.0
        %1046 = vmatpush1.msra.mxu0 0.0
        %1047 = vmatprep.subr.mxu0 0.0
        %1048 = vmatpush1.msra.mxu0 0.0
        %1049 = vmatprep.subr.mxu0 0.0
        %1050 = vmatpush1.msra.mxu0 0.0
        %1051 = vmatprep.subr.mxu0 0.0
        %1052 = vmatpush1.msra.mxu0 0.0
        %1053 = vmatprep.subr.mxu0 0.0
        %1054 = vmatpush1.msra.mxu0 0.0
        %1055 = vmatprep.subr.mxu0 0.0
        %1056 = vmatpush1.msra.mxu0 0.0
        %1057 = vmatprep.subr.mxu0 0.0
        %1058 = vmatpush1.msra.mxu0 0.0
        %1059 = vmatprep.subr.mxu0 0.0
        %1060 = vmatpush1.msra.mxu0 0.0
        %1061 = vmatprep.subr.mxu0 0.0
        %1062 = vmatpush1.msra.mxu0 0.0
        %1063 = vmatprep.subr.mxu0 0.0
        %1064 = vmatpush1.msra.mxu0 0.0
        %1065 = vmatprep.subr.mxu0 0.0
        %1066 = vmatpush1.msra.mxu0 0.0
        %1067 = vmatprep.subr.mxu0 0.0
        %1068 = vmatpush1.msra.mxu0 0.0
        %1069 = vmatprep.subr.mxu0 0.0
        %1070 = vmatpush1.msra.mxu0 0.0
        %1071 = vmatprep.subr.mxu0 0.0
        %1072 = vmatpush1.msra.mxu0 0.0
        %1073 = vmatprep.subr.mxu0 0.0
        %1074 = vmatpush1.msra.mxu0 0.0
        %1075 = vmatprep.subr.mxu0 0.0
        %1076 = vmatpush1.msra.mxu0 0.0
        %1077 = vmatprep.subr.mxu0 0.0
        %1078 = vmatpush1.msra.mxu0 0.0
        %1079 = vmatprep.subr.mxu0 0.0
        %1080 = vmatpush1.msra.mxu0 0.0
        %1081 = vmatprep.subr.mxu0 0.0
        %1082 = vmatpush1.msra.mxu0 0.0
        %1083 = vmatprep.mubr.f32.mxu0 0.0
        %v1084 = vand.u32 %v396, 4294901760
        %v1085 = vsub.f32 %v396, %v1084
        %v1086 = vand.u32 %v1085, 4294901760
        %1087 = vmatmul.mubr.f32.gmra.mrb[0].mxu0 %v1086
        %v1088 = vpop.f32.mrb[0].mxu0
        %v1089 = vadd.f32 %v910, %v1088
        %v1090 = vpop.f32.mrb[0].mxu0
        %1091 = vmatprep.mubr.f32.mxu0 0.0
        %v1092 = vand.u32 %v399, 4294901760
        %v1093 = vsub.f32 %v399, %v1092
        %v1094 = vand.u32 %v1093, 4294901760
        %1095 = vmatmul.mubr.f32.gmra.mrb[0].mxu0 %v1094
        %v1096 = vpop.f32.mrb[0].mxu0
        %v1097 = vadd.f32 %v917, %v1096
        %v1098 = vpop.f32.mrb[0].mxu0
        %1099 = vmatprep.mubr.f32.mxu0 0.0
        %v1100 = vand.u32 %v402, 4294901760
        %v1101 = vsub.f32 %v402, %v1100
        %v1102 = vand.u32 %v1101, 4294901760
        %1103 = vmatmul.mubr.f32.gmra.mrb[0].mxu0 %v1102
        %v1104 = vpop.f32.mrb[0].mxu0
        %v1105 = vadd.f32 %v924, %v1104
        %v1106 = vpop.f32.mrb[0].mxu0
        %1107 = vmatprep.mubr.f32.mxu0 0.0
        %v1108 = vand.u32 %v405, 4294901760
        %v1109 = vsub.f32 %v405, %v1108
        %v1110 = vand.u32 %v1109, 4294901760
        %1111 = vmatmul.mubr.f32.gmra.mrb[0].mxu0 %v1110
        %v1112 = vpop.f32.mrb[0].mxu0
        %v1113 = vadd.f32 %v931, %v1112
        %v1114 = vpop.f32.mrb[0].mxu0
        %1115 = vmatprep.mubr.f32.mxu0 0.0
        %v1116 = vand.u32 %v408, 4294901760
        %v1117 = vsub.f32 %v408, %v1116
        %v1118 = vand.u32 %v1117, 4294901760
        %1119 = vmatmul.mubr.f32.gmra.mrb[0].mxu0 %v1118
        %v1120 = vpop.f32.mrb[0].mxu0
        %v1121 = vadd.f32 %v938, %v1120
        %v1122 = vpop.f32.mrb[0].mxu0
        %1123 = vmatprep.mubr.f32.mxu0 0.0
        %v1124 = vand.u32 %v411, 4294901760
        %v1125 = vsub.f32 %v411, %v1124
        %v1126 = vand.u32 %v1125, 4294901760
        %1127 = vmatmul.mubr.f32.gmra.mrb[0].mxu0 %v1126
        %v1128 = vpop.f32.mrb[0].mxu0
        %v1129 = vadd.f32 %v945, %v1128
        %v1130 = vpop.f32.mrb[0].mxu0
        %1131 = vmatprep.mubr.f32.mxu0 0.0
        %v1132 = vand.u32 %v414, 4294901760
        %v1133 = vsub.f32 %v414, %v1132
        %v1134 = vand.u32 %v1133, 4294901760
        %1135 = vmatmul.mubr.f32.gmra.mrb[0].mxu0 %v1134
        %v1136 = vpop.f32.mrb[0].mxu0
        %v1137 = vadd.f32 %v952, %v1136
        %v1138 = vpop.f32.mrb[0].mxu0
        %1139 = vmatprep.mubr.f32.mxu0 0.0
        %v1140 = vand.u32 %v417, 4294901760
        %v1141 = vsub.f32 %v417, %v1140
        %v1142 = vand.u32 %v1141, 4294901760
        %1143 = vmatmul.mubr.f32.gmra.mrb[0].mxu0 %v1142
        %v1144 = vpop.f32.mrb[0].mxu0
        %v1145 = vadd.f32 %v959, %v1144
        %v1146 = vpop.f32.mrb[0].mxu0
        %1147 = vmatprep.mubr.f32.mxu0 0.0
        %v1148 = vand.u32 %v420, 4294901760
        %v1149 = vsub.f32 %v420, %v1148
        %v1150 = vand.u32 %v1149, 4294901760
        %1151 = vmatmul.mubr.f32.gmra.mrb[0].mxu0 %v1150
        %v1152 = vpop.f32.mrb[0].mxu0
        %v1153 = vadd.f32 %v966, %v1152
        %v1154 = vpop.f32.mrb[0].mxu0
        %1155 = vmatprep.mubr.f32.mxu0 0.0
        %v1156 = vand.u32 %v423, 4294901760
        %v1157 = vsub.f32 %v423, %v1156
        %v1158 = vand.u32 %v1157, 4294901760
        %1159 = vmatmul.mubr.f32.gmra.mrb[0].mxu0 %v1158
        %v1160 = vpop.f32.mrb[0].mxu0
        %v1161 = vadd.f32 %v973, %v1160
        %v1162 = vpop.f32.mrb[0].mxu0
        %1163 = vmatprep.mubr.f32.mxu0 0.0
        %v1164 = vand.u32 %v426, 4294901760
        %v1165 = vsub.f32 %v426, %v1164
        %v1166 = vand.u32 %v1165, 4294901760
        %1167 = vmatmul.mubr.f32.gmra.mrb[0].mxu0 %v1166
        %v1168 = vpop.f32.mrb[0].mxu0
        %v1169 = vadd.f32 %v980, %v1168
        %v1170 = vpop.f32.mrb[0].mxu0
        %1171 = vmatprep.mubr.f32.mxu0 0.0
        %v1172 = vand.u32 %v429, 4294901760
        %v1173 = vsub.f32 %v429, %v1172
        %v1174 = vand.u32 %v1173, 4294901760
        %1175 = vmatmul.mubr.f32.gmra.mrb[0].mxu0 %v1174
        %v1176 = vpop.f32.mrb[0].mxu0
        %v1177 = vadd.f32 %v987, %v1176
        %v1178 = vpop.f32.mrb[0].mxu0
        %1179 = vmatprep.mubr.f32.mxu0 0.0
        %v1180 = vand.u32 %v432, 4294901760
        %v1181 = vsub.f32 %v432, %v1180
        %v1182 = vand.u32 %v1181, 4294901760
        %1183 = vmatmul.mubr.f32.gmra.mrb[0].mxu0 %v1182
        %v1184 = vpop.f32.mrb[0].mxu0
        %v1185 = vadd.f32 %v994, %v1184
        %v1186 = vpop.f32.mrb[0].mxu0
        %1187 = vmatprep.mubr.f32.mxu0 0.0
        %v1188 = vand.u32 %v435, 4294901760
        %v1189 = vsub.f32 %v435, %v1188
        %v1190 = vand.u32 %v1189, 4294901760
        %1191 = vmatmul.mubr.f32.gmra.mrb[0].mxu0 %v1190
        %v1192 = vpop.f32.mrb[0].mxu0
        %v1193 = vadd.f32 %v1001, %v1192
        %v1194 = vpop.f32.mrb[0].mxu0
        %1195 = vmatprep.mubr.f32.mxu0 0.0
        %v1196 = vand.u32 %v438, 4294901760
        %v1197 = vsub.f32 %v438, %v1196
        %v1198 = vand.u32 %v1197, 4294901760
        %1199 = vmatmul.mubr.f32.gmra.mrb[0].mxu0 %v1198
        %v1200 = vpop.f32.mrb[0].mxu0
        %v1201 = vadd.f32 %v1008, %v1200
        %v1202 = vpop.f32.mrb[0].mxu0
        %1203 = vmatprep.mubr.f32.mxu0 0.0
        %v1204 = vand.u32 %v441, 4294901760
        %v1205 = vsub.f32 %v441, %v1204
        %v1206 = vand.u32 %v1205, 4294901760
        %1207 = vmatmul.mubr.f32.gmra.mrb[0].mxu0 %v1206
        %v1208 = vpop.f32.mrb[0].mxu0
        %v1209 = vadd.f32 %v1015, %v1208
        %v1210 = vpop.f32.mrb[0].mxu0
        %1211 = vdwg.mxu0
        %1212 = vmatprep.subr.mxu0 0.0
        %v1213 = vand.u32 %v445, 4294901760
        %v1214 = vsub.f32 %v445, %v1213
        %v1215 = vand.u32 %v1214, 4294901760
        %1216 = vmatpush1.msra.mxu0 %v1215
        %1217 = vmatprep.subr.mxu0 0.0
        %1218 = vmatpush1.msra.mxu0 0.0
        %1219 = vmatprep.subr.mxu0 0.0
        %1220 = vmatpush1.msra.mxu0 0.0
        %1221 = vmatprep.subr.mxu0 0.0
        %1222 = vmatpush1.msra.mxu0 0.0
        %1223 = vmatprep.subr.mxu0 0.0
        %1224 = vmatpush1.msra.mxu0 0.0
        %1225 = vmatprep.subr.mxu0 0.0
        %1226 = vmatpush1.msra.mxu0 0.0
        %1227 = vmatprep.subr.mxu0 0.0
        %1228 = vmatpush1.msra.mxu0 0.0
        %1229 = vmatprep.subr.mxu0 0.0
        %1230 = vmatpush1.msra.mxu0 0.0
        %1231 = vmatprep.subr.mxu0 0.0
        %1232 = vmatpush1.msra.mxu0 0.0
        %1233 = vmatprep.subr.mxu0 0.0
        %1234 = vmatpush1.msra.mxu0 0.0
        %1235 = vmatprep.subr.mxu0 0.0
        %1236 = vmatpush1.msra.mxu0 0.0
        %1237 = vmatprep.subr.mxu0 0.0
        %1238 = vmatpush1.msra.mxu0 0.0
        %1239 = vmatprep.subr.mxu0 0.0
        %1240 = vmatpush1.msra.mxu0 0.0
        %1241 = vmatprep.subr.mxu0 0.0
        %1242 = vmatpush1.msra.mxu0 0.0
        %1243 = vmatprep.subr.mxu0 0.0
        %1244 = vmatpush1.msra.mxu0 0.0
        %1245 = vmatprep.subr.mxu0 0.0
        %1246 = vmatpush1.msra.mxu0 0.0
        %1247 = vmatprep.subr.mxu0 0.0
        %1248 = vmatpush1.msra.mxu0 0.0
        %1249 = vmatprep.subr.mxu0 0.0
        %1250 = vmatpush1.msra.mxu0 0.0
        %1251 = vmatprep.subr.mxu0 0.0
        %1252 = vmatpush1.msra.mxu0 0.0
        %1253 = vmatprep.subr.mxu0 0.0
        %1254 = vmatpush1.msra.mxu0 0.0
        %1255 = vmatprep.subr.mxu0 0.0
        %1256 = vmatpush1.msra.mxu0 0.0
        %1257 = vmatprep.subr.mxu0 0.0
        %1258 = vmatpush1.msra.mxu0 0.0
        %1259 = vmatprep.subr.mxu0 0.0
        %1260 = vmatpush1.msra.mxu0 0.0
        %1261 = vmatprep.subr.mxu0 0.0
        %1262 = vmatpush1.msra.mxu0 0.0
        %1263 = vmatprep.subr.mxu0 0.0
        %1264 = vmatpush1.msra.mxu0 0.0
        %1265 = vmatprep.subr.mxu0 0.0
        %1266 = vmatpush1.msra.mxu0 0.0
        %1267 = vmatprep.subr.mxu0 0.0
        %1268 = vmatpush1.msra.mxu0 0.0
        %1269 = vmatprep.subr.mxu0 0.0
        %1270 = vmatpush1.msra.mxu0 0.0
        %1271 = vmatprep.subr.mxu0 0.0
        %1272 = vmatpush1.msra.mxu0 0.0
        %1273 = vmatprep.subr.mxu0 0.0
        %1274 = vmatpush1.msra.mxu0 0.0
        %1275 = vmatprep.subr.mxu0 0.0
        %1276 = vmatpush1.msra.mxu0 0.0
        %1277 = vmatprep.subr.mxu0 0.0
        %1278 = vmatpush1.msra.mxu0 0.0
        %1279 = vmatprep.mubr.f32.mxu0 0.0
        %v1280 = vand.u32 %v396, 4294901760
        %1281 = vmatmul.mubr.f32.gmra.mrb[0].mxu0 %v1280
        %v1282 = vpop.f32.mrb[0].mxu0
        %v1283 = vadd.f32 %v1089, %v1282
        %v1284 = vpop.f32.mrb[0].mxu0
        %1285 = vmatprep.mubr.f32.mxu0 0.0
        %v1286 = vand.u32 %v399, 4294901760
        %1287 = vmatmul.mubr.f32.gmra.mrb[0].mxu0 %v1286
        %v1288 = vpop.f32.mrb[0].mxu0
        %v1289 = vadd.f32 %v1097, %v1288
        %v1290 = vpop.f32.mrb[0].mxu0
        %1291 = vmatprep.mubr.f32.mxu0 0.0
        %v1292 = vand.u32 %v402, 4294901760
        %1293 = vmatmul.mubr.f32.gmra.mrb[0].mxu0 %v1292
        %v1294 = vpop.f32.mrb[0].mxu0
        %v1295 = vadd.f32 %v1105, %v1294
        %v1296 = vpop.f32.mrb[0].mxu0
        %1297 = vmatprep.mubr.f32.mxu0 0.0
        %v1298 = vand.u32 %v405, 4294901760
        %1299 = vmatmul.mubr.f32.gmra.mrb[0].mxu0 %v1298
        %v1300 = vpop.f32.mrb[0].mxu0
        %v1301 = vadd.f32 %v1113, %v1300
        %v1302 = vpop.f32.mrb[0].mxu0
        %1303 = vmatprep.mubr.f32.mxu0 0.0
        %v1304 = vand.u32 %v408, 4294901760
        %1305 = vmatmul.mubr.f32.gmra.mrb[0].mxu0 %v1304
        %v1306 = vpop.f32.mrb[0].mxu0
        %v1307 = vadd.f32 %v1121, %v1306
        %v1308 = vpop.f32.mrb[0].mxu0
        %1309 = vmatprep.mubr.f32.mxu0 0.0
        %v1310 = vand.u32 %v411, 4294901760
        %1311 = vmatmul.mubr.f32.gmra.mrb[0].mxu0 %v1310
        %v1312 = vpop.f32.mrb[0].mxu0
        %v1313 = vadd.f32 %v1129, %v1312
        %v1314 = vpop.f32.mrb[0].mxu0
        %1315 = vmatprep.mubr.f32.mxu0 0.0
        %v1316 = vand.u32 %v414, 4294901760
        %1317 = vmatmul.mubr.f32.gmra.mrb[0].mxu0 %v1316
        %v1318 = vpop.f32.mrb[0].mxu0
        %v1319 = vadd.f32 %v1137, %v1318
        %v1320 = vpop.f32.mrb[0].mxu0
        %1321 = vmatprep.mubr.f32.mxu0 0.0
        %v1322 = vand.u32 %v417, 4294901760
        %1323 = vmatmul.mubr.f32.gmra.mrb[0].mxu0 %v1322
        %v1324 = vpop.f32.mrb[0].mxu0
        %v1325 = vadd.f32 %v1145, %v1324
        %v1326 = vpop.f32.mrb[0].mxu0
        %1327 = vmatprep.mubr.f32.mxu0 0.0
        %v1328 = vand.u32 %v420, 4294901760
        %1329 = vmatmul.mubr.f32.gmra.mrb[0].mxu0 %v1328
        %v1330 = vpop.f32.mrb[0].mxu0
        %v1331 = vadd.f32 %v1153, %v1330
        %v1332 = vpop.f32.mrb[0].mxu0
        %1333 = vmatprep.mubr.f32.mxu0 0.0
        %v1334 = vand.u32 %v423, 4294901760
        %1335 = vmatmul.mubr.f32.gmra.mrb[0].mxu0 %v1334
        %v1336 = vpop.f32.mrb[0].mxu0
        %v1337 = vadd.f32 %v1161, %v1336
        %v1338 = vpop.f32.mrb[0].mxu0
        %1339 = vmatprep.mubr.f32.mxu0 0.0
        %v1340 = vand.u32 %v426, 4294901760
        %1341 = vmatmul.mubr.f32.gmra.mrb[0].mxu0 %v1340
        %v1342 = vpop.f32.mrb[0].mxu0
        %v1343 = vadd.f32 %v1169, %v1342
        %v1344 = vpop.f32.mrb[0].mxu0
        %1345 = vmatprep.mubr.f32.mxu0 0.0
        %v1346 = vand.u32 %v429, 4294901760
        %1347 = vmatmul.mubr.f32.gmra.mrb[0].mxu0 %v1346
        %v1348 = vpop.f32.mrb[0].mxu0
        %v1349 = vadd.f32 %v1177, %v1348
        %v1350 = vpop.f32.mrb[0].mxu0
        %1351 = vmatprep.mubr.f32.mxu0 0.0
        %v1352 = vand.u32 %v432, 4294901760
        %1353 = vmatmul.mubr.f32.gmra.mrb[0].mxu0 %v1352
        %v1354 = vpop.f32.mrb[0].mxu0
        %v1355 = vadd.f32 %v1185, %v1354
        %v1356 = vpop.f32.mrb[0].mxu0
        %1357 = vmatprep.mubr.f32.mxu0 0.0
        %v1358 = vand.u32 %v435, 4294901760
        %1359 = vmatmul.mubr.f32.gmra.mrb[0].mxu0 %v1358
        %v1360 = vpop.f32.mrb[0].mxu0
        %v1361 = vadd.f32 %v1193, %v1360
        %v1362 = vpop.f32.mrb[0].mxu0
        %1363 = vmatprep.mubr.f32.mxu0 0.0
        %v1364 = vand.u32 %v438, 4294901760
        %1365 = vmatmul.mubr.f32.gmra.mrb[0].mxu0 %v1364
        %v1366 = vpop.f32.mrb[0].mxu0
        %v1367 = vadd.f32 %v1201, %v1366
        %v1368 = vpop.f32.mrb[0].mxu0
        %1369 = vmatprep.mubr.f32.mxu0 0.0
        %v1370 = vand.u32 %v441, 4294901760
        %1371 = vmatmul.mubr.f32.gmra.mrb[0].mxu0 %v1370
        %v1372 = vpop.f32.mrb[0].mxu0
        %v1373 = vadd.f32 %v1209, %v1372
        %v1374 = vpop.f32.mrb[0].mxu0
        %1375 = vdwg.mxu0
        %1376 = vmatprep.subr.mxu0 0.0
        %v1377 = vand.u32 %v445, 4294901760
        %1378 = vmatpush1.msra.mxu0 %v1377
        %1379 = vmatprep.subr.mxu0 0.0
        %1380 = vmatpush1.msra.mxu0 0.0
        %1381 = vmatprep.subr.mxu0 0.0
        %1382 = vmatpush1.msra.mxu0 0.0
        %1383 = vmatprep.subr.mxu0 0.0
        %1384 = vmatpush1.msra.mxu0 0.0
        %1385 = vmatprep.subr.mxu0 0.0
        %1386 = vmatpush1.msra.mxu0 0.0
        %1387 = vmatprep.subr.mxu0 0.0
        %1388 = vmatpush1.msra.mxu0 0.0
        %1389 = vmatprep.subr.mxu0 0.0
        %1390 = vmatpush1.msra.mxu0 0.0
        %1391 = vmatprep.subr.mxu0 0.0
        %1392 = vmatpush1.msra.mxu0 0.0
        %1393 = vmatprep.subr.mxu0 0.0
        %1394 = vmatpush1.msra.mxu0 0.0
        %1395 = vmatprep.subr.mxu0 0.0
        %1396 = vmatpush1.msra.mxu0 0.0
        %1397 = vmatprep.subr.mxu0 0.0
        %1398 = vmatpush1.msra.mxu0 0.0
        %1399 = vmatprep.subr.mxu0 0.0
        %1400 = vmatpush1.msra.mxu0 0.0
        %1401 = vmatprep.subr.mxu0 0.0
        %1402 = vmatpush1.msra.mxu0 0.0
        %1403 = vmatprep.subr.mxu0 0.0
        %1404 = vmatpush1.msra.mxu0 0.0
        %1405 = vmatprep.subr.mxu0 0.0
        %1406 = vmatpush1.msra.mxu0 0.0
        %1407 = vmatprep.subr.mxu0 0.0
        %1408 = vmatpush1.msra.mxu0 0.0
        %1409 = vmatprep.subr.mxu0 0.0
        %1410 = vmatpush1.msra.mxu0 0.0
        %1411 = vmatprep.subr.mxu0 0.0
        %1412 = vmatpush1.msra.mxu0 0.0
        %1413 = vmatprep.subr.mxu0 0.0
        %1414 = vmatpush1.msra.mxu0 0.0
        %1415 = vmatprep.subr.mxu0 0.0
        %1416 = vmatpush1.msra.mxu0 0.0
        %1417 = vmatprep.subr.mxu0 0.0
        %1418 = vmatpush1.msra.mxu0 0.0
        %1419 = vmatprep.subr.mxu0 0.0
        %1420 = vmatpush1.msra.mxu0 0.0
        %1421 = vmatprep.subr.mxu0 0.0
        %1422 = vmatpush1.msra.mxu0 0.0
        %1423 = vmatprep.subr.mxu0 0.0
        %1424 = vmatpush1.msra.mxu0 0.0
        %1425 = vmatprep.subr.mxu0 0.0
        %1426 = vmatpush1.msra.mxu0 0.0
        %1427 = vmatprep.subr.mxu0 0.0
        %1428 = vmatpush1.msra.mxu0 0.0
        %1429 = vmatprep.subr.mxu0 0.0
        %1430 = vmatpush1.msra.mxu0 0.0
        %1431 = vmatprep.subr.mxu0 0.0
        %1432 = vmatpush1.msra.mxu0 0.0
        %1433 = vmatprep.subr.mxu0 0.0
        %1434 = vmatpush1.msra.mxu0 0.0
        %1435 = vmatprep.subr.mxu0 0.0
        %1436 = vmatpush1.msra.mxu0 0.0
        %1437 = vmatprep.subr.mxu0 0.0
        %1438 = vmatpush1.msra.mxu0 0.0
        %1439 = vmatprep.subr.mxu0 0.0
        %1440 = vmatpush1.msra.mxu0 0.0
        %1441 = vmatprep.mubr.f32.mxu0 0.0
        %v1442 = vand.u32 %v396, 4294901760
        %1443 = vmatmul.mubr.f32.gmra.mrb[0].mxu0 %v1442
        %v1444 = vpop.f32.mrb[0].mxu0
        %v1445 = vadd.f32 %v1283, %v1444
        %v1446 = vpop.f32.mrb[0].mxu0
        %1447 = vmatprep.mubr.f32.mxu0 0.0
        %v1448 = vand.u32 %v399, 4294901760
        %1449 = vmatmul.mubr.f32.gmra.mrb[0].mxu0 %v1448
        %v1450 = vpop.f32.mrb[0].mxu0
        %v1451 = vadd.f32 %v1289, %v1450
        %v1452 = vpop.f32.mrb[0].mxu0
        %1453 = vmatprep.mubr.f32.mxu0 0.0
        %v1454 = vand.u32 %v402, 4294901760
        %1455 = vmatmul.mubr.f32.gmra.mrb[0].mxu0 %v1454
        %v1456 = vpop.f32.mrb[0].mxu0
        %v1457 = vadd.f32 %v1295, %v1456
        %v1458 = vpop.f32.mrb[0].mxu0
        %1459 = vmatprep.mubr.f32.mxu0 0.0
        %v1460 = vand.u32 %v405, 4294901760
        %1461 = vmatmul.mubr.f32.gmra.mrb[0].mxu0 %v1460
        %v1462 = vpop.f32.mrb[0].mxu0
        %v1463 = vadd.f32 %v1301, %v1462
        %v1464 = vpop.f32.mrb[0].mxu0
        %1465 = vmatprep.mubr.f32.mxu0 0.0
        %v1466 = vand.u32 %v408, 4294901760
        %1467 = vmatmul.mubr.f32.gmra.mrb[0].mxu0 %v1466
        %v1468 = vpop.f32.mrb[0].mxu0
        %v1469 = vadd.f32 %v1307, %v1468
        %v1470 = vpop.f32.mrb[0].mxu0
        %1471 = vmatprep.mubr.f32.mxu0 0.0
        %v1472 = vand.u32 %v411, 4294901760
        %1473 = vmatmul.mubr.f32.gmra.mrb[0].mxu0 %v1472
        %v1474 = vpop.f32.mrb[0].mxu0
        %v1475 = vadd.f32 %v1313, %v1474
        %v1476 = vpop.f32.mrb[0].mxu0
        %1477 = vmatprep.mubr.f32.mxu0 0.0
        %v1478 = vand.u32 %v414, 4294901760
        %1479 = vmatmul.mubr.f32.gmra.mrb[0].mxu0 %v1478
        %v1480 = vpop.f32.mrb[0].mxu0
        %v1481 = vadd.f32 %v1319, %v1480
        %v1482 = vpop.f32.mrb[0].mxu0
        %1483 = vmatprep.mubr.f32.mxu0 0.0
        %v1484 = vand.u32 %v417, 4294901760
        %1485 = vmatmul.mubr.f32.gmra.mrb[0].mxu0 %v1484
        %v1486 = vpop.f32.mrb[0].mxu0
        %v1487 = vadd.f32 %v1325, %v1486
        %v1488 = vpop.f32.mrb[0].mxu0
        %1489 = vmatprep.mubr.f32.mxu0 0.0
        %v1490 = vand.u32 %v420, 4294901760
        %1491 = vmatmul.mubr.f32.gmra.mrb[0].mxu0 %v1490
        %v1492 = vpop.f32.mrb[0].mxu0
        %v1493 = vadd.f32 %v1331, %v1492
        %v1494 = vpop.f32.mrb[0].mxu0
        %1495 = vmatprep.mubr.f32.mxu0 0.0
        %v1496 = vand.u32 %v423, 4294901760
        %1497 = vmatmul.mubr.f32.gmra.mrb[0].mxu0 %v1496
        %v1498 = vpop.f32.mrb[0].mxu0
        %v1499 = vadd.f32 %v1337, %v1498
        %v1500 = vpop.f32.mrb[0].mxu0
        %1501 = vmatprep.mubr.f32.mxu0 0.0
        %v1502 = vand.u32 %v426, 4294901760
        %1503 = vmatmul.mubr.f32.gmra.mrb[0].mxu0 %v1502
        %v1504 = vpop.f32.mrb[0].mxu0
        %v1505 = vadd.f32 %v1343, %v1504
        %v1506 = vpop.f32.mrb[0].mxu0
        %1507 = vmatprep.mubr.f32.mxu0 0.0
        %v1508 = vand.u32 %v429, 4294901760
        %1509 = vmatmul.mubr.f32.gmra.mrb[0].mxu0 %v1508
        %v1510 = vpop.f32.mrb[0].mxu0
        %v1511 = vadd.f32 %v1349, %v1510
        %v1512 = vpop.f32.mrb[0].mxu0
        %1513 = vmatprep.mubr.f32.mxu0 0.0
        %v1514 = vand.u32 %v432, 4294901760
        %1515 = vmatmul.mubr.f32.gmra.mrb[0].mxu0 %v1514
        %v1516 = vpop.f32.mrb[0].mxu0
        %v1517 = vadd.f32 %v1355, %v1516
        %v1518 = vpop.f32.mrb[0].mxu0
        %1519 = vmatprep.mubr.f32.mxu0 0.0
        %v1520 = vand.u32 %v435, 4294901760
        %1521 = vmatmul.mubr.f32.gmra.mrb[0].mxu0 %v1520
        %v1522 = vpop.f32.mrb[0].mxu0
        %v1523 = vadd.f32 %v1361, %v1522
        %v1524 = vpop.f32.mrb[0].mxu0
        %1525 = vmatprep.mubr.f32.mxu0 0.0
        %v1526 = vand.u32 %v438, 4294901760
        %1527 = vmatmul.mubr.f32.gmra.mrb[0].mxu0 %v1526
        %v1528 = vpop.f32.mrb[0].mxu0
        %v1529 = vadd.f32 %v1367, %v1528
        %v1530 = vpop.f32.mrb[0].mxu0
        %1531 = vmatprep.mubr.f32.mxu0 0.0
        %v1532 = vand.u32 %v441, 4294901760
        %1533 = vmatmul.mubr.f32.gmra.mrb[0].mxu0 %v1532
        %v1534 = vpop.f32.mrb[0].mxu0
        %v1535 = vadd.f32 %v1373, %v1534
        %v1536 = vpop.f32.mrb[0].mxu0
        %1537 = vdwg.mxu0
        %v1538 = vmax.f32 %v1445, 0.0
        %v1539 = vmax.f32 %v1451, 0.0
        %v1540 = vmax.f32 %v1457, 0.0
        %v1541 = vmax.f32 %v1463, 0.0
        %v1542 = vmax.f32 %v1469, 0.0
        %v1543 = vmax.f32 %v1475, 0.0
        %v1544 = vmax.f32 %v1481, 0.0
        %v1545 = vmax.f32 %v1487, 0.0
        %v1546 = vmax.f32 %v1493, 0.0
        %v1547 = vmax.f32 %v1499, 0.0
        %v1548 = vmax.f32 %v1505, 0.0
        %v1549 = vmax.f32 %v1511, 0.0
        %v1550 = vmax.f32 %v1517, 0.0
        %v1551 = vmax.f32 %v1523, 0.0
        %v1552 = vmax.f32 %v1529, 0.0
        %v1553 = vmax.f32 %v1535, 0.0
        %v1554 = vld [vmem:[#allocation2] sm:$0xff]
        %v1555 = vld [vmem:[#allocation2 + $0x8] sm:$0xff]
        %v1556 = vld [vmem:[#allocation2 + $0x10] sm:$0xff]
        %v1557 = vld [vmem:[#allocation2 + $0x18] sm:$0xff]
        %v1558 = vld [vmem:[#allocation2 + $0x20] sm:$0xff]
        %v1559 = vld [vmem:[#allocation2 + $0x28] sm:$0xff]
        %v1560 = vld [vmem:[#allocation2 + $0x30] sm:$0xff]
        %v1561 = vld [vmem:[#allocation2 + $0x38] sm:$0xff]
        %v1562 = vld [vmem:[#allocation2 + $0x40] sm:$0xff]
        %v1563 = vld [vmem:[#allocation2 + $0x48] sm:$0xff]
        %v1564 = vld [vmem:[#allocation2 + $0x50] sm:$0xff]
        %v1565 = vld [vmem:[#allocation2 + $0x58] sm:$0xff]
        %v1566 = vld [vmem:[#allocation2 + $0x60] sm:$0xff]
        %v1567 = vld [vmem:[#allocation2 + $0x68] sm:$0xff]
        %v1568 = vld [vmem:[#allocation2 + $0x70] sm:$0xff]
        %v1569 = vld [vmem:[#allocation2 + $0x78] sm:$0xff]
        %v1570 = vadd.f32 %v1554, %v1538
        %v1571 = vadd.f32 %v1555, %v1539
        %v1572 = vadd.f32 %v1556, %v1540
        %v1573 = vadd.f32 %v1557, %v1541
        %v1574 = vadd.f32 %v1558, %v1542
        %v1575 = vadd.f32 %v1559, %v1543
        %v1576 = vadd.f32 %v1560, %v1544
        %v1577 = vadd.f32 %v1561, %v1545
        %v1578 = vadd.f32 %v1562, %v1546
        %v1579 = vadd.f32 %v1563, %v1547
        %v1580 = vadd.f32 %v1564, %v1548
        %v1581 = vadd.f32 %v1565, %v1549
        %v1582 = vadd.f32 %v1566, %v1550
        %v1583 = vadd.f32 %v1567, %v1551
        %v1584 = vadd.f32 %v1568, %v1552
        %v1585 = vadd.f32 %v1569, %v1553
        %1586 = vst [vmem:[#allocation2] sm:$0xff] %v1570
        %1587 = vst [vmem:[#allocation2 + $0x8] sm:$0xff] %v1571
        %1588 = vst [vmem:[#allocation2 + $0x10] sm:$0xff] %v1572
        %1589 = vst [vmem:[#allocation2 + $0x18] sm:$0xff] %v1573
        %1590 = vst [vmem:[#allocation2 + $0x20] sm:$0xff] %v1574
        %1591 = vst [vmem:[#allocation2 + $0x28] sm:$0xff] %v1575
        %1592 = vst [vmem:[#allocation2 + $0x30] sm:$0xff] %v1576
        %1593 = vst [vmem:[#allocation2 + $0x38] sm:$0xff] %v1577
        %1594 = vst [vmem:[#allocation2 + $0x40] sm:$0xff] %v1578
        %1595 = vst [vmem:[#allocation2 + $0x48] sm:$0xff] %v1579
        %1596 = vst [vmem:[#allocation2 + $0x50] sm:$0xff] %v1580
        %1597 = vst [vmem:[#allocation2 + $0x58] sm:$0xff] %v1581
        %1598 = vst [vmem:[#allocation2 + $0x60] sm:$0xff] %v1582
        %1599 = vst [vmem:[#allocation2 + $0x68] sm:$0xff] %v1583
        %1600 = vst [vmem:[#allocation2 + $0x70] sm:$0xff] %v1584
        %1601 = vst [vmem:[#allocation2 + $0x78] sm:$0xff] %v1585
        // Predicated region
        $region45: #{tpu_custom_call.1} parent=39 // pred_check
          %p1602 = pneg %p244
        $region46: #{tpu_custom_call.1} parent=39 // pred_check_branch
          %1604 = sbr.rel (%p1602) target = $region48
        $region47: #{tpu_custom_call.1} parent=39 // pred_region
          %v1605 = vld [vmem:[#allocation2] sm:$0xff]
          %v1606 = vld [vmem:[#allocation2 + $0x8] sm:$0xff]
          %v1607 = vld [vmem:[#allocation2 + $0x10] sm:$0xff]
          %v1608 = vld [vmem:[#allocation2 + $0x18] sm:$0xff]
          %v1609 = vld [vmem:[#allocation2 + $0x20] sm:$0xff]
          %v1610 = vld [vmem:[#allocation2 + $0x28] sm:$0xff]
          %v1611 = vld [vmem:[#allocation2 + $0x30] sm:$0xff]
          %v1612 = vld [vmem:[#allocation2 + $0x38] sm:$0xff]
          %v1613 = vld [vmem:[#allocation2 + $0x40] sm:$0xff]
          %v1614 = vld [vmem:[#allocation2 + $0x48] sm:$0xff]
          %v1615 = vld [vmem:[#allocation2 + $0x50] sm:$0xff]
          %v1616 = vld [vmem:[#allocation2 + $0x58] sm:$0xff]
          %v1617 = vld [vmem:[#allocation2 + $0x60] sm:$0xff]
          %v1618 = vld [vmem:[#allocation2 + $0x68] sm:$0xff]
          %v1619 = vld [vmem:[#allocation2 + $0x70] sm:$0xff]
          %v1620 = vld [vmem:[#allocation2 + $0x78] sm:$0xff]
          %v1621 = vld [vmem:[%s3] sm:$0xff]
          %v1622 = vld [vmem:[%s3 + $0x8] sm:$0xff]
          %v1623 = vld [vmem:[%s3 + $0x10] sm:$0xff]
          %v1624 = vld [vmem:[%s3 + $0x18] sm:$0xff]
          %v1625 = vld [vmem:[%s3 + $0x20] sm:$0xff]
          %v1626 = vld [vmem:[%s3 + $0x28] sm:$0xff]
          %v1627 = vld [vmem:[%s3 + $0x30] sm:$0xff]
          %v1628 = vld [vmem:[%s3 + $0x38] sm:$0xff]
          %v1629 = vld [vmem:[%s3 + $0x40] sm:$0xff]
          %v1630 = vld [vmem:[%s3 + $0x48] sm:$0xff]
          %v1631 = vld [vmem:[%s3 + $0x50] sm:$0xff]
          %v1632 = vld [vmem:[%s3 + $0x58] sm:$0xff]
          %v1633 = vld [vmem:[%s3 + $0x60] sm:$0xff]
          %v1634 = vld [vmem:[%s3 + $0x68] sm:$0xff]
          %v1635 = vld [vmem:[%s3 + $0x70] sm:$0xff]
          %v1636 = vld [vmem:[%s3 + $0x78] sm:$0xff]
          %1638 = vset.pattern.permute.xlu0 0
          %1639 = vperm.xlu0 %1638, %v1621
          %v1640 = vpop.permute.xlu0 %1639
          %1643 = vset.pattern.permute.xlu0 0
          %1644 = vperm.xlu0 %1643, %v1622
          %v1645 = vpop.permute.xlu0 %1644
          %1648 = vset.pattern.permute.xlu0 0
          %1649 = vperm.xlu0 %1648, %v1623
          %v1650 = vpop.permute.xlu0 %1649
          %1653 = vset.pattern.permute.xlu0 0
          %1654 = vperm.xlu0 %1653, %v1624
          %v1655 = vpop.permute.xlu0 %1654
          %1658 = vset.pattern.permute.xlu0 0
          %1659 = vperm.xlu0 %1658, %v1625
          %v1660 = vpop.permute.xlu0 %1659
          %1663 = vset.pattern.permute.xlu0 0
          %1664 = vperm.xlu0 %1663, %v1626
          %v1665 = vpop.permute.xlu0 %1664
          %1668 = vset.pattern.permute.xlu0 0
          %1669 = vperm.xlu0 %1668, %v1627
          %v1670 = vpop.permute.xlu0 %1669
          %1673 = vset.pattern.permute.xlu0 0
          %1674 = vperm.xlu0 %1673, %v1628
          %v1675 = vpop.permute.xlu0 %1674
          %1678 = vset.pattern.permute.xlu0 0
          %1679 = vperm.xlu0 %1678, %v1629
          %v1680 = vpop.permute.xlu0 %1679
          %1683 = vset.pattern.permute.xlu0 0
          %1684 = vperm.xlu0 %1683, %v1630
          %v1685 = vpop.permute.xlu0 %1684
          %1688 = vset.pattern.permute.xlu0 0
          %1689 = vperm.xlu0 %1688, %v1631
          %v1690 = vpop.permute.xlu0 %1689
          %1693 = vset.pattern.permute.xlu0 0
          %1694 = vperm.xlu0 %1693, %v1632
          %v1695 = vpop.permute.xlu0 %1694
          %1698 = vset.pattern.permute.xlu0 0
          %1699 = vperm.xlu0 %1698, %v1633
          %v1700 = vpop.permute.xlu0 %1699
          %1703 = vset.pattern.permute.xlu0 0
          %1704 = vperm.xlu0 %1703, %v1634
          %v1705 = vpop.permute.xlu0 %1704
          %1708 = vset.pattern.permute.xlu0 0
          %1709 = vperm.xlu0 %1708, %v1635
          %v1710 = vpop.permute.xlu0 %1709
          %1713 = vset.pattern.permute.xlu0 0
          %1714 = vperm.xlu0 %1713, %v1636
          %v1715 = vpop.permute.xlu0 %1714
          %v1717 = vmul.f32 %v1605, %v1640
          %v1718 = vmul.f32 %v1606, %v1645
          %v1719 = vmul.f32 %v1607, %v1650
          %v1720 = vmul.f32 %v1608, %v1655
          %v1721 = vmul.f32 %v1609, %v1660
          %v1722 = vmul.f32 %v1610, %v1665
          %v1723 = vmul.f32 %v1611, %v1670
          %v1724 = vmul.f32 %v1612, %v1675
          %v1725 = vmul.f32 %v1613, %v1680
          %v1726 = vmul.f32 %v1614, %v1685
          %v1727 = vmul.f32 %v1615, %v1690
          %v1728 = vmul.f32 %v1616, %v1695
          %v1729 = vmul.f32 %v1617, %v1700
          %v1730 = vmul.f32 %v1618, %v1705
          %v1731 = vmul.f32 %v1619, %v1710
          %v1732 = vmul.f32 %v1620, %v1715
          %v1733 = vadd.f32 %v1717, %v1718
          %v1734 = vadd.f32 %v1733, %v1719
          %v1735 = vadd.f32 %v1734, %v1720
          %v1736 = vadd.f32 %v1735, %v1721
          %v1737 = vadd.f32 %v1736, %v1722
          %v1738 = vadd.f32 %v1737, %v1723
          %v1739 = vadd.f32 %v1738, %v1724
          %v1740 = vadd.f32 %v1739, %v1725
          %v1741 = vadd.f32 %v1740, %v1726
          %v1742 = vadd.f32 %v1741, %v1727
          %v1743 = vadd.f32 %v1742, %v1728
          %v1744 = vadd.f32 %v1743, %v1729
          %v1745 = vadd.f32 %v1744, %v1730
          %v1746 = vadd.f32 %v1745, %v1731
          %v1747 = vadd.f32 %v1746, %v1732
          %1748 = vadd.xlane.f32.xlu0 %v1747
          %v1749 = vpop.xlane.xlu0 %1748
          %v1750 = vrot.slane %v1749, 4
          %v1751 = vadd.f32 %v1749, %v1750
          %v1752 = vrot.slane %v1751, 2
          %v1753 = vadd.f32 %v1751, %v1752
          %v1754 = vrot.slane %v1753, 1
          %v1755 = vadd.f32 %v1753, %v1754
          %s1756 = vtos %v1755
          %s1757 = smul.f32 %s1756, 0.0078125
          %s1758 = sld [smem:[#allocation3]]
          %s1759 = sadd.f32 %s1757, %s1758
          %v1760 = vstv %s1759
          %1761 = vst [vmem:[%s236] sm:$0xff] %v1760
        $region48: #{tpu_custom_call.1} parent=39 // pred_fallthru
          _
        %s1762 = sand.u32 %s152, 1
        %s1763 = scalar_lea.sflag [#allocation5], %s1762
        %s1764 = sand.u32 %s152, 1
        %s1765 = smul.addr %s1764, 8
        %s1766 = scalar_lea.vmem [#allocation4], %s1765
        // Predicated region
        $region49: #{tpu_custom_call.1} parent=39 // pred_check
          %p1767 = pneg %p162
        $region50: #{tpu_custom_call.1} parent=39 // pred_check_branch
          %1769 = sbr.rel (%p1767) target = $region52
        $region51: #{tpu_custom_call.1} parent=39 // pred_region
          %s1771 = ssub.s32 128, 128
          %1772 = vsyncadd %s1763, %s1771
          %s1773 = smul.addr %s24, 128
          %s1774 = scalar_lea.hbm %s5, %s1773
          %s1776 = sshll.u32 %s1766, 4
          %s1777 = int_to_ptr.vmem [resolvable:$true] %s1776
          %1779 = dma.vmem_to_hbm [thread:$0]  %s1777, 128, %s1774, %s1763
        $region52: #{tpu_custom_call.1} parent=39 // pred_fallthru
          _
      $region40: #{tpu_custom_call.1} parent=5 // pred_fallthru
        _
      %p1780 = scmp.le.s32.totalorder 2, %s15
      // Predicated region
      $region53: #{tpu_custom_call.1} parent=5 // pred_check
        %p1781 = pneg %p1780
      $region54: #{tpu_custom_call.1} parent=5 // pred_check_branch
        %1783 = sbr.rel (%p1781) target = $region56
      $region55: #{tpu_custom_call.1} parent=5 // pred_region
        %s1784 = ssub.s32 %s15, 2
        // Predicated region
        $region57: #{tpu_custom_call.1} parent=55 // pred_check
          %p1785 = pneg %p168
        $region58: #{tpu_custom_call.1} parent=55 // pred_check_branch
          %1787 = sbr.rel (%p1785) target = $region60
        $region59: #{tpu_custom_call.1} parent=55 // pred_region
          %s1788 = sand.u32 %s153, 1
          %s1789 = scalar_lea.sflag [#allocation5], %s1788
          %s1790 = sand.u32 %s153, 1
          %s1791 = smul.addr %s1790, 8
          %s1792 = scalar_lea.vmem [#allocation4], %s1791
          %1793 = dma.done %s1789, 128
        $region60: #{tpu_custom_call.1} parent=55 // pred_fallthru
          _
      $region56: #{tpu_custom_call.1} parent=5 // pred_fallthru
        _
    $region6: #{tpu_custom_call.1} parent=1 // loop_footer
      %s19 = sadd.s32 1, %s15
    $region7: #{tpu_custom_call.1} parent=1 // loop_footer_branch
      %14 = sbr.rel target = $region3
    $region8: #{tpu_custom_call.1} parent=1 // loop_exit
      _
    %1794 = vsyncpa [#allocation5], 1
    %s1795 = scalar_lea.sflag [#allocation5], 1
    %1796 = vsyncpa %s1795, 1

</llo_original>
